<compile_context>
chip_gen: v7x
topology: tpu7x:2x2x1
jax: 0.10.0
libtpu: 0.0.40
codegen_flags: <defaults>
</compile_context>

<pallas_src>
import jax
import jax.numpy as jnp
import numpy as np
from jax.experimental import pallas as pl
from jax.experimental.pallas import tpu as pltpu

KERNEL_SIZES = (3, 5, 7)
MAX_PAD = max(KERNEL_SIZES) // 2
N_OFFSETS = 2 * MAX_PAD + 1          # distinct tap offsets: -3 .. +3
LANE = 128                           # lane width (last-dim alignment)
SUBLANE = 16                         # sublane alignment (covers bf16 packing)

_PADS = tuple(k // 2 for k in KERNEL_SIZES)
# For each offset index i (offset d = i - MAX_PAD): the branches whose kernel
# covers that offset, in the order their blocks are stacked along N.
_COVER = tuple(tuple(b for b, p in enumerate(_PADS) if abs(i - MAX_PAD) <= p)
               for i in range(N_OFFSETS))


def _round_up(v, m):
    return (v + m - 1) // m * m


def _spacing_kernel(emb_ref, *refs):
    """One batch tile per grid step, flattened (rows, channels) layout.

    emb_ref  : (R, Ep)         zero-padded, flattened embedded chars
    w_refs[i]: (Ep, n_i*Fp)    offset-i conv weights, covering branches
                               stacked along N (n_i = len(_COVER[i]))
    bconv_ref: (3, Fp)         conv biases (f32), one row per branch
    wc_ref   : (3*Fp, NLp)     1x1 classifier weight (compute dtype)
    bc_ref   : (1, NLp)        classifier bias (f32, lane padded)
    out_ref  : (R, NLp)        logits for every padded row (valid rows are
                               sliced out by the wrapper)
    """
    w_refs = refs[:N_OFFSETS]
    bconv_ref, wc_ref, bc_ref, out_ref = refs[N_OFFSETS:]

    x = emb_ref[...]                               # (R, Ep) bf16/f32
    rows = x.shape[0]
    b_all = bconv_ref[...]                         # (3, Fp) f32
    n_branch = b_all.shape[0]
    f_pad = b_all.shape[1]
    wc_all = wc_ref[...]                           # (3*Fp, NLp)

    # Per-offset matmul + one shared roll, accumulated per branch (f32).
    accs = [None] * n_branch
    for i, cov in enumerate(_COVER):               # static unrolled offsets
        d = i - MAX_PAD
        y = jnp.dot(x, w_refs[i][...],
                    preferred_element_type=jnp.float32)    # (R, n_i*Fp)
        shift = (-d) % rows
        if shift:
            # out[r] needs x[r + d] -> roll the f32 output rows by -d (XLU).
            # Wrap-around only lands in per-sequence zero-pad rows that the
            # wrapper discards, so kept rows are exact.
            y = pltpu.roll(y, shift, axis=0)
        for p_idx, b in enumerate(cov):
            piece = y[:, p_idx * f_pad:(p_idx + 1) * f_pad]
            accs[b] = piece if accs[b] is None else accs[b] + piece

    # Per-branch bias + ReLU (f32), then classifier matmul in compute dtype
    # with f32 accumulation; accumulate the three branch contributions.
    logits = None
    for b in range(n_branch):
        feat = jnp.maximum(accs[b] + b_all[b:b + 1, :], 0.0)
        contrib = jnp.dot(feat.astype(wc_all.dtype),
                          wc_all[b * f_pad:(b + 1) * f_pad, :],
                          preferred_element_type=jnp.float32)
        logits = contrib if logits is None else logits + contrib

    out_ref[...] = (logits + bc_ref[...]).astype(out_ref.dtype)


def _choose_block_batch(batch, lp, e_pad, f_pad, nl_pad, in_itemsize,
                        out_itemsize, fixed_bytes,
                        vmem_budget_bytes, min_grid_steps):
    """Largest divisor of `batch` whose working set fits the VMEM budget while
    keeping >= min_grid_steps grid steps (even step counts preferred for
    v7x's two TensorCores)."""
    budget = max(vmem_budget_bytes - fixed_bytes, 1 << 20)
    per_row = (2 * e_pad * in_itemsize        # emb block, double-buffered
               + 2 * nl_pad * out_itemsize    # out block, double-buffered
               + e_pad * in_itemsize          # loaded activation value
               + 3 * f_pad * 4                # largest per-offset matmul out
               + 3 * f_pad * 4                # branch accumulators (f32)
               + f_pad * in_itemsize          # feat cast for classifier
               + nl_pad * 4)                  # f32 logits before store cast
    fitting = [tb for tb in range(1, batch + 1)
               if batch % tb == 0 and tb * lp * per_row <= budget]
    if not fitting:
        return 1
    min_steps = min(min_grid_steps, batch)
    good = [tb for tb in fitting if batch // tb >= min_steps]
    pool = good if good else fitting
    best = max(pool)
    # Prefer an even number of grid steps without shrinking the tile > 2x.
    for tb in sorted(pool, reverse=True):
        if (batch // tb) % 2 == 0:
            if tb * 2 >= best:
                best = tb
            break
    return best


def korean_spacing_cnn(x, params, *, compute_dtype=jnp.bfloat16,
                       out_dtype=None, block_batch=None,
                       vmem_budget_bytes=16 * 1024 * 1024,
                       vmem_limit_bytes=40 * 1024 * 1024,
                       min_grid_steps=4):
    """x: int32 (B, L) char indices -> float32 (B, L, num_labels) logits."""
    emb_table = params["embedding"]                    # (V, E)
    batch, seq_len = x.shape
    vocab, emb_dim = emb_table.shape
    num_filters = params["conv3_w"].shape[0]
    num_labels = params["cls_b"].shape[0]
    n_branch = len(KERNEL_SIZES)

    if out_dtype is None:
        out_dtype = jnp.float32 if compute_dtype == jnp.float32 else jnp.bfloat16

    lp = _round_up(seq_len + 2 * MAX_PAD, SUBLANE)     # padded, aligned length
    e_pad = _round_up(emb_dim, LANE)                   # lane-dense contraction
    f_pad = _round_up(num_filters, LANE)               # lane-dense branch width
    nl_pad = _round_up(num_labels, LANE)               # lane-dense output width

    # --- glue: fused gather + conv zero padding (single gather, no pad pass).
    table_ext = jnp.pad(emb_table, ((0, 1), (0, e_pad - emb_dim))
                        ).astype(compute_dtype)        # row `vocab` is all-zero
    x_pad = jnp.pad(x, ((0, 0), (MAX_PAD, lp - seq_len - MAX_PAD)),
                    constant_values=vocab)
    emb_flat = table_ext[x_pad.reshape(-1)]            # (B*Lp, Ep)

    # --- per-offset conv weights: for offset d, stack the covering branches'
    #     (E, F) tap matrices along N (zero-padded to Ep x n_i*Fp).
    w_list = []
    for i, cov in enumerate(_COVER):
        d = i - MAX_PAD
        w_off = jnp.zeros((e_pad, len(cov) * f_pad), jnp.float32)
        for p_idx, b in enumerate(cov):
            k = KERNEL_SIZES[b]
            tap = jnp.transpose(params[f"conv{k}_w"][:, :, d + k // 2], (1, 0))
            w_off = w_off.at[:emb_dim,
                             p_idx * f_pad:p_idx * f_pad + num_filters].set(tap)
        w_list.append(w_off.astype(compute_dtype))

    bconv = jnp.zeros((n_branch, f_pad), jnp.float32)
    for b, k in enumerate(KERNEL_SIZES):
        bconv = bconv.at[b, :num_filters].set(params[f"conv{k}_b"])

    # 1x1 classifier as one (3*Fp, NLp) matrix in the compute dtype.
    wc = jnp.zeros((n_branch * f_pad, nl_pad), jnp.float32)
    for b in range(n_branch):
        part = params["cls_w"][:, b * num_filters:(b + 1) * num_filters, 0]
        wc = wc.at[b * f_pad:b * f_pad + num_filters, :num_labels].set(part.T)
    wc = wc.astype(compute_dtype)
    bc = jnp.pad(params["cls_b"], (0, nl_pad - num_labels)
                 ).astype(jnp.float32)[None, :]        # (1, NLp)

    in_itemsize = np.dtype(compute_dtype).itemsize
    out_itemsize = np.dtype(out_dtype).itemsize
    fixed_bytes = 2 * (sum(w.size for w in w_list) * in_itemsize
                       + bconv.size * 4 + wc.size * in_itemsize + bc.size * 4)
    if block_batch is None:
        block_batch = _choose_block_batch(
            batch, lp, e_pad, f_pad, nl_pad, in_itemsize, out_itemsize,
            fixed_bytes, vmem_budget_bytes, min_grid_steps)
    assert batch % block_batch == 0
    rows = block_batch * lp

    in_specs = (
        [pl.BlockSpec((rows, e_pad), lambda b: (b, 0))]
        + [pl.BlockSpec(w.shape, lambda b: (0, 0)) for w in w_list]
        + [pl.BlockSpec((n_branch, f_pad), lambda b: (0, 0)),
           pl.BlockSpec((n_branch * f_pad, nl_pad), lambda b: (0, 0)),
           pl.BlockSpec((1, nl_pad), lambda b: (0, 0))]
    )

    out_flat = pl.pallas_call(
        _spacing_kernel,
        out_shape=jax.ShapeDtypeStruct((batch * lp, nl_pad), out_dtype),
        grid_spec=pltpu.PrefetchScalarGridSpec(
            num_scalar_prefetch=0,
            grid=(batch // block_batch,),
            in_specs=in_specs,
            out_specs=pl.BlockSpec((rows, nl_pad), lambda b: (b, 0)),
        ),
        compiler_params=pltpu.CompilerParams(
            dimension_semantics=("parallel",),
            vmem_limit_bytes=vmem_limit_bytes),
    )(emb_flat, *w_list, bconv, wc, bc)

    # Drop the conv/alignment padding rows and the label-lane padding.
    out = out_flat.reshape(batch, lp, nl_pad)
    return out[:, MAX_PAD:MAX_PAD + seq_len, :num_labels].astype(jnp.float32)


def init_params(key, vocab_size, embedding_dim, num_filters, num_labels):
    """Deterministic synthetic parameters with PyTorch-equivalent shapes."""
    keys = jax.random.split(key, 1 + 2 * len(KERNEL_SIZES) + 2)
    params = {}
    emb = 0.1 * jax.random.normal(keys[0], (vocab_size, embedding_dim),
                                  jnp.float32)
    emb = emb.at[0].set(0.0)  # padding_idx=0
    params["embedding"] = emb
    i = 1
    for k in KERNEL_SIZES:
        params[f"conv{k}_w"] = 0.05 * jax.random.normal(
            keys[i], (num_filters, embedding_dim, k), jnp.float32)
        params[f"conv{k}_b"] = 0.01 * jax.random.normal(
            keys[i + 1], (num_filters,), jnp.float32)
        i += 2
    params["cls_w"] = 0.05 * jax.random.normal(
        keys[i], (num_labels, num_filters * len(KERNEL_SIZES), 1), jnp.float32)
    params["cls_b"] = 0.01 * jax.random.normal(
        keys[i + 1], (num_labels,), jnp.float32)
    return params


def reference(x, params):
    """Plain-JAX replica of the PyTorch forward (NCH conv layout, f32)."""
    emb = params["embedding"][x]                 # (B, L, E)
    emb_t = jnp.transpose(emb, (0, 2, 1))        # (B, E, L)
    outs = []
    for k in KERNEL_SIZES:
        w = params[f"conv{k}_w"]                 # (F, E, k)
        b = params[f"conv{k}_b"]
        o = jax.lax.conv_general_dilated(
            emb_t, w, window_strides=(1,), padding=[(k // 2, k // 2)],
            dimension_numbers=("NCH", "OIH", "NCH"))
        o = jax.nn.relu(o + b[None, :, None])
        outs.append(o)
    cat = jnp.concatenate(outs, axis=1)          # (B, 3F, L)
    logits = jax.lax.conv_general_dilated(
        cat, params["cls_w"], (1,), [(0, 0)],
        dimension_numbers=("NCH", "OIH", "NCH")) + params["cls_b"][None, :, None]
    return jnp.transpose(logits, (0, 2, 1))      # (B, L, NL)


if __name__ == "__main__":
    # Small, forward-consistent shapes.
    vocab_size = 50
    embedding_dim = 32
    num_filters = 16
    num_labels = 2
    batch, seq_len = 2, 8

    key = jax.random.PRNGKey(0)
    k_params, k_x = jax.random.split(key)
    params = init_params(k_params, vocab_size, embedding_dim,
                         num_filters, num_labels)
    x = jax.random.randint(k_x, (batch, seq_len), 0, vocab_size,
                           dtype=jnp.int32)

    ref = jax.block_until_ready(reference(x, params))

    # Exact-semantics check: kernel end-to-end in f32.
    out_f32 = jax.block_until_ready(
        korean_spacing_cnn(x, params, compute_dtype=jnp.float32))
    assert out_f32.shape == (batch, seq_len, num_labels)
    np.testing.assert_allclose(np.asarray(out_f32), np.asarray(ref),
                               atol=1e-4, rtol=1e-4)

    # Fast path: bf16 activations/weights (convs + classifier) with f32
    # accumulation and bf16 logits writeback, vs. the f32 reference.
    out_bf16 = jax.block_until_ready(korean_spacing_cnn(x, params))
    assert out_bf16.shape == (batch, seq_len, num_labels)
    np.testing.assert_allclose(np.asarray(out_bf16), np.asarray(ref),
                               atol=2e-2, rtol=2e-2)

    print("KERNEL_OK")
</pallas_src>

<mosaic_0001>
module attributes {stable_mosaic.version = 11 : i64} {
  func.func @_spacing_kernel(%arg0: i32, %arg1: memref<16x128xf32, #tpu.memory_space<vmem>>, %arg2: memref<128x128xf32, #tpu.memory_space<vmem>>, %arg3: memref<128x256xf32, #tpu.memory_space<vmem>>, %arg4: memref<128x384xf32, #tpu.memory_space<vmem>>, %arg5: memref<128x384xf32, #tpu.memory_space<vmem>>, %arg6: memref<128x384xf32, #tpu.memory_space<vmem>>, %arg7: memref<128x256xf32, #tpu.memory_space<vmem>>, %arg8: memref<128x128xf32, #tpu.memory_space<vmem>>, %arg9: memref<3x128xf32, #tpu.memory_space<vmem>>, %arg10: memref<384x128xf32, #tpu.memory_space<vmem>>, %arg11: memref<1x128xf32, #tpu.memory_space<vmem>>, %arg12: memref<16x128xf32, #tpu.memory_space<vmem>>) attributes {dimension_semantics = [#tpu.dimension_semantics<parallel>], iteration_bounds = array<i64: 2>, scalar_prefetch = 0 : i64, scratch_operands = 0 : i64, tpu.core_type = #tpu.core_type<tc>, window_params = [{transform_indices = @transform_0, window_bounds = array<i64: 16, 128>}, {pipeline_mode = #tpu.pipeline_mode<synchronous>, transform_indices = @transform_1, window_bounds = array<i64: 128, 128>}, {pipeline_mode = #tpu.pipeline_mode<synchronous>, transform_indices = @transform_2, window_bounds = array<i64: 128, 256>}, {pipeline_mode = #tpu.pipeline_mode<synchronous>, transform_indices = @transform_3, window_bounds = array<i64: 128, 384>}, {pipeline_mode = #tpu.pipeline_mode<synchronous>, transform_indices = @transform_4, window_bounds = array<i64: 128, 384>}, {pipeline_mode = #tpu.pipeline_mode<synchronous>, transform_indices = @transform_5, window_bounds = array<i64: 128, 384>}, {pipeline_mode = #tpu.pipeline_mode<synchronous>, transform_indices = @transform_6, window_bounds = array<i64: 128, 256>}, {pipeline_mode = #tpu.pipeline_mode<synchronous>, transform_indices = @transform_7, window_bounds = array<i64: 128, 128>}, {pipeline_mode = #tpu.pipeline_mode<synchronous>, transform_indices = @transform_8, window_bounds = array<i64: 3, 128>}, {pipeline_mode = #tpu.pipeline_mode<synchronous>, transform_indices = @transform_9, window_bounds = array<i64: 384, 128>}, {pipeline_mode = #tpu.pipeline_mode<synchronous>, transform_indices = @transform_10, window_bounds = array<i64: 1, 128>}, {transform_indices = @transform_11, window_bounds = array<i64: 16, 128>}]} {
    %c0 = arith.constant 0 : index
    %c0_0 = arith.constant 0 : index
    %0 = vector.load %arg1[%c0, %c0_0] : memref<16x128xf32, #tpu.memory_space<vmem>>, vector<16x128xf32>
    %c0_1 = arith.constant 0 : index
    %c0_2 = arith.constant 0 : index
    %1 = vector.load %arg9[%c0_1, %c0_2] : memref<3x128xf32, #tpu.memory_space<vmem>>, vector<3x128xf32>
    %c0_3 = arith.constant 0 : index
    %c0_4 = arith.constant 0 : index
    %2 = vector.load %arg10[%c0_3, %c0_4] : memref<384x128xf32, #tpu.memory_space<vmem>>, vector<384x128xf32>
    %c0_5 = arith.constant 0 : index
    %c0_6 = arith.constant 0 : index
    %3 = vector.load %arg2[%c0_5, %c0_6] : memref<128x128xf32, #tpu.memory_space<vmem>>, vector<128x128xf32>
    %cst = arith.constant dense<0.000000e+00> : vector<16x128xf32>
    %4 = tpu.matmul %0, %3, %cst {dimension_numbers = #tpu.dot_dimension_numbers<[1], [0], [0], [1], [0, 0, 1, 1], [], []>} : vector<16x128xf32>, vector<128x128xf32>, vector<16x128xf32> -> vector<16x128xf32>
    %c3_i32 = arith.constant 3 : i32
    %5 = tpu.dynamic_rotate %4 by %c3_i32 dim 0 : vector<16x128xf32>, i32 -> vector<16x128xf32>
    %c0_7 = arith.constant 0 : index
    %c0_8 = arith.constant 0 : index
    %6 = vector.load %arg3[%c0_7, %c0_8] : memref<128x256xf32, #tpu.memory_space<vmem>>, vector<128x256xf32>
    %cst_9 = arith.constant dense<0.000000e+00> : vector<16x256xf32>
    %7 = tpu.matmul %0, %6, %cst_9 {dimension_numbers = #tpu.dot_dimension_numbers<[1], [0], [0], [1], [0, 0, 1, 1], [], []>} : vector<16x128xf32>, vector<128x256xf32>, vector<16x256xf32> -> vector<16x256xf32>
    %c2_i32 = arith.constant 2 : i32
    %8 = tpu.dynamic_rotate %7 by %c2_i32 dim 0 : vector<16x256xf32>, i32 -> vector<16x256xf32>
    %9 = vector.extract_strided_slice %8 {offsets = [0, 0], sizes = [16, 128], strides = [1, 1]} : vector<16x256xf32> to vector<16x128xf32>
    %10 = vector.extract_strided_slice %8 {offsets = [0, 128], sizes = [16, 128], strides = [1, 1]} : vector<16x256xf32> to vector<16x128xf32>
    %11 = arith.addf %5, %10 : vector<16x128xf32>
    %c0_10 = arith.constant 0 : index
    %c0_11 = arith.constant 0 : index
    %12 = vector.load %arg4[%c0_10, %c0_11] : memref<128x384xf32, #tpu.memory_space<vmem>>, vector<128x384xf32>
    %cst_12 = arith.constant dense<0.000000e+00> : vector<16x384xf32>
    %13 = tpu.matmul %0, %12, %cst_12 {dimension_numbers = #tpu.dot_dimension_numbers<[1], [0], [0], [1], [0, 0, 1, 1], [], []>} : vector<16x128xf32>, vector<128x384xf32>, vector<16x384xf32> -> vector<16x384xf32>
    %c1_i32 = arith.constant 1 : i32
    %14 = tpu.dynamic_rotate %13 by %c1_i32 dim 0 : vector<16x384xf32>, i32 -> vector<16x384xf32>
    %15 = vector.extract_strided_slice %14 {offsets = [0, 0], sizes = [16, 128], strides = [1, 1]} : vector<16x384xf32> to vector<16x128xf32>
    %16 = vector.extract_strided_slice %14 {offsets = [0, 128], sizes = [16, 128], strides = [1, 1]} : vector<16x384xf32> to vector<16x128xf32>
    %17 = arith.addf %9, %16 : vector<16x128xf32>
    %18 = vector.extract_strided_slice %14 {offsets = [0, 256], sizes = [16, 128], strides = [1, 1]} : vector<16x384xf32> to vector<16x128xf32>
    %19 = arith.addf %11, %18 : vector<16x128xf32>
    %c0_13 = arith.constant 0 : index
    %c0_14 = arith.constant 0 : index
    %20 = vector.load %arg5[%c0_13, %c0_14] : memref<128x384xf32, #tpu.memory_space<vmem>>, vector<128x384xf32>
    %cst_15 = arith.constant dense<0.000000e+00> : vector<16x384xf32>
    %21 = tpu.matmul %0, %20, %cst_15 {dimension_numbers = #tpu.dot_dimension_numbers<[1], [0], [0], [1], [0, 0, 1, 1], [], []>} : vector<16x128xf32>, vector<128x384xf32>, vector<16x384xf32> -> vector<16x384xf32>
    %22 = vector.extract_strided_slice %21 {offsets = [0, 0], sizes = [16, 128], strides = [1, 1]} : vector<16x384xf32> to vector<16x128xf32>
    %23 = arith.addf %15, %22 : vector<16x128xf32>
    %24 = vector.extract_strided_slice %21 {offsets = [0, 128], sizes = [16, 128], strides = [1, 1]} : vector<16x384xf32> to vector<16x128xf32>
    %25 = arith.addf %17, %24 : vector<16x128xf32>
    %26 = vector.extract_strided_slice %21 {offsets = [0, 256], sizes = [16, 128], strides = [1, 1]} : vector<16x384xf32> to vector<16x128xf32>
    %27 = arith.addf %19, %26 : vector<16x128xf32>
    %c0_16 = arith.constant 0 : index
    %c0_17 = arith.constant 0 : index
    %28 = vector.load %arg6[%c0_16, %c0_17] : memref<128x384xf32, #tpu.memory_space<vmem>>, vector<128x384xf32>
    %cst_18 = arith.constant dense<0.000000e+00> : vector<16x384xf32>
    %29 = tpu.matmul %0, %28, %cst_18 {dimension_numbers = #tpu.dot_dimension_numbers<[1], [0], [0], [1], [0, 0, 1, 1], [], []>} : vector<16x128xf32>, vector<128x384xf32>, vector<16x384xf32> -> vector<16x384xf32>
    %c15_i32 = arith.constant 15 : i32
    %30 = tpu.dynamic_rotate %29 by %c15_i32 dim 0 : vector<16x384xf32>, i32 -> vector<16x384xf32>
    %31 = vector.extract_strided_slice %30 {offsets = [0, 0], sizes = [16, 128], strides = [1, 1]} : vector<16x384xf32> to vector<16x128xf32>
    %32 = arith.addf %23, %31 : vector<16x128xf32>
    %33 = vector.extract_strided_slice %30 {offsets = [0, 128], sizes = [16, 128], strides = [1, 1]} : vector<16x384xf32> to vector<16x128xf32>
    %34 = arith.addf %25, %33 : vector<16x128xf32>
    %35 = vector.extract_strided_slice %30 {offsets = [0, 256], sizes = [16, 128], strides = [1, 1]} : vector<16x384xf32> to vector<16x128xf32>
    %36 = arith.addf %27, %35 : vector<16x128xf32>
    %c0_19 = arith.constant 0 : index
    %c0_20 = arith.constant 0 : index
    %37 = vector.load %arg7[%c0_19, %c0_20] : memref<128x256xf32, #tpu.memory_space<vmem>>, vector<128x256xf32>
    %cst_21 = arith.constant dense<0.000000e+00> : vector<16x256xf32>
    %38 = tpu.matmul %0, %37, %cst_21 {dimension_numbers = #tpu.dot_dimension_numbers<[1], [0], [0], [1], [0, 0, 1, 1], [], []>} : vector<16x128xf32>, vector<128x256xf32>, vector<16x256xf32> -> vector<16x256xf32>
    %c14_i32 = arith.constant 14 : i32
    %39 = tpu.dynamic_rotate %38 by %c14_i32 dim 0 : vector<16x256xf32>, i32 -> vector<16x256xf32>
    %40 = vector.extract_strided_slice %39 {offsets = [0, 0], sizes = [16, 128], strides = [1, 1]} : vector<16x256xf32> to vector<16x128xf32>
    %41 = arith.addf %34, %40 : vector<16x128xf32>
    %42 = vector.extract_strided_slice %39 {offsets = [0, 128], sizes = [16, 128], strides = [1, 1]} : vector<16x256xf32> to vector<16x128xf32>
    %43 = arith.addf %36, %42 : vector<16x128xf32>
    %c0_22 = arith.constant 0 : index
    %c0_23 = arith.constant 0 : index
    %44 = vector.load %arg8[%c0_22, %c0_23] : memref<128x128xf32, #tpu.memory_space<vmem>>, vector<128x128xf32>
    %cst_24 = arith.constant dense<0.000000e+00> : vector<16x128xf32>
    %45 = tpu.matmul %0, %44, %cst_24 {dimension_numbers = #tpu.dot_dimension_numbers<[1], [0], [0], [1], [0, 0, 1, 1], [], []>} : vector<16x128xf32>, vector<128x128xf32>, vector<16x128xf32> -> vector<16x128xf32>
    %c13_i32 = arith.constant 13 : i32
    %46 = tpu.dynamic_rotate %45 by %c13_i32 dim 0 : vector<16x128xf32>, i32 -> vector<16x128xf32>
    %47 = arith.addf %43, %46 : vector<16x128xf32>
    %48 = vector.extract_strided_slice %1 {offsets = [0, 0], sizes = [1, 128], strides = [1, 1]} : vector<3x128xf32> to vector<1x128xf32>
    %49 = vector.broadcast %48 : vector<1x128xf32> to vector<16x128xf32>
    %50 = arith.addf %32, %49 : vector<16x128xf32>
    %cst_25 = arith.constant 0.000000e+00 : f32
    %51 = vector.broadcast %cst_25 : f32 to vector<16x128xf32>
    %52 = arith.maximumf %50, %51 : vector<16x128xf32>
    %53 = vector.extract_strided_slice %2 {offsets = [0, 0], sizes = [128, 128], strides = [1, 1]} : vector<384x128xf32> to vector<128x128xf32>
    %cst_26 = arith.constant dense<0.000000e+00> : vector<16x128xf32>
    %54 = tpu.matmul %52, %53, %cst_26 {dimension_numbers = #tpu.dot_dimension_numbers<[1], [0], [0], [1], [0, 0, 1, 1], [], []>} : vector<16x128xf32>, vector<128x128xf32>, vector<16x128xf32> -> vector<16x128xf32>
    %55 = vector.extract_strided_slice %1 {offsets = [1, 0], sizes = [1, 128], strides = [1, 1]} : vector<3x128xf32> to vector<1x128xf32>
    %56 = vector.broadcast %55 : vector<1x128xf32> to vector<16x128xf32>
    %57 = arith.addf %41, %56 : vector<16x128xf32>
    %cst_27 = arith.constant 0.000000e+00 : f32
    %58 = vector.broadcast %cst_27 : f32 to vector<16x128xf32>
    %59 = arith.maximumf %57, %58 : vector<16x128xf32>
    %60 = vector.extract_strided_slice %2 {offsets = [128, 0], sizes = [128, 128], strides = [1, 1]} : vector<384x128xf32> to vector<128x128xf32>
    %cst_28 = arith.constant dense<0.000000e+00> : vector<16x128xf32>
    %61 = tpu.matmul %59, %60, %cst_28 {dimension_numbers = #tpu.dot_dimension_numbers<[1], [0], [0], [1], [0, 0, 1, 1], [], []>} : vector<16x128xf32>, vector<128x128xf32>, vector<16x128xf32> -> vector<16x128xf32>
    %62 = arith.addf %54, %61 : vector<16x128xf32>
    %63 = vector.extract_strided_slice %1 {offsets = [2, 0], sizes = [1, 128], strides = [1, 1]} : vector<3x128xf32> to vector<1x128xf32>
    %64 = vector.broadcast %63 : vector<1x128xf32> to vector<16x128xf32>
    %65 = arith.addf %47, %64 : vector<16x128xf32>
    %cst_29 = arith.constant 0.000000e+00 : f32
    %66 = vector.broadcast %cst_29 : f32 to vector<16x128xf32>
    %67 = arith.maximumf %65, %66 : vector<16x128xf32>
    %68 = vector.extract_strided_slice %2 {offsets = [256, 0], sizes = [128, 128], strides = [1, 1]} : vector<384x128xf32> to vector<128x128xf32>
    %cst_30 = arith.constant dense<0.000000e+00> : vector<16x128xf32>
    %69 = tpu.matmul %67, %68, %cst_30 {dimension_numbers = #tpu.dot_dimension_numbers<[1], [0], [0], [1], [0, 0, 1, 1], [], []>} : vector<16x128xf32>, vector<128x128xf32>, vector<16x128xf32> -> vector<16x128xf32>
    %70 = arith.addf %62, %69 : vector<16x128xf32>
    %c0_31 = arith.constant 0 : index
    %c0_32 = arith.constant 0 : index
    %71 = vector.load %arg11[%c0_31, %c0_32] : memref<1x128xf32, #tpu.memory_space<vmem>>, vector<1x128xf32>
    %72 = vector.broadcast %71 : vector<1x128xf32> to vector<16x128xf32>
    %73 = arith.addf %70, %72 : vector<16x128xf32>
    %c0_33 = arith.constant 0 : index
    %c0_34 = arith.constant 0 : index
    %74 = vector.load %arg12[%c0_33, %c0_34] : memref<16x128xf32, #tpu.memory_space<vmem>>, vector<16x128xf32>
    tpu.vector_store %arg12[%c0_33, %c0_34], %73 {strides = array<i32>} : memref<16x128xf32, #tpu.memory_space<vmem>>, vector<16x128xf32>,
    return
  }
  func.func @transform_0(%arg0: i32) -> (i32, i32) {
    %c0_i32 = arith.constant 0 : i32
    %c0_i32_0 = arith.constant 0 : i32
    return %arg0, %c0_i32 : i32, i32
  }
  func.func @transform_1(%arg0: i32) -> (i32, i32) {
    %c0_i32 = arith.constant 0 : i32
    %c0_i32_0 = arith.constant 0 : i32
    %c0_i32_1 = arith.constant 0 : i32
    return %c0_i32, %c0_i32_0 : i32, i32
  }
  func.func @transform_2(%arg0: i32) -> (i32, i32) {
    %c0_i32 = arith.constant 0 : i32
    %c0_i32_0 = arith.constant 0 : i32
    %c0_i32_1 = arith.constant 0 : i32
    return %c0_i32, %c0_i32_0 : i32, i32
  }
  func.func @transform_3(%arg0: i32) -> (i32, i32) {
    %c0_i32 = arith.constant 0 : i32
    %c0_i32_0 = arith.constant 0 : i32
    %c0_i32_1 = arith.constant 0 : i32
    return %c0_i32, %c0_i32_0 : i32, i32
  }
  func.func @transform_4(%arg0: i32) -> (i32, i32) {
    %c0_i32 = arith.constant 0 : i32
    %c0_i32_0 = arith.constant 0 : i32
    %c0_i32_1 = arith.constant 0 : i32
    return %c0_i32, %c0_i32_0 : i32, i32
  }
  func.func @transform_5(%arg0: i32) -> (i32, i32) {
    %c0_i32 = arith.constant 0 : i32
    %c0_i32_0 = arith.constant 0 : i32
    %c0_i32_1 = arith.constant 0 : i32
    return %c0_i32, %c0_i32_0 : i32, i32
  }
  func.func @transform_6(%arg0: i32) -> (i32, i32) {
    %c0_i32 = arith.constant 0 : i32
    %c0_i32_0 = arith.constant 0 : i32
    %c0_i32_1 = arith.constant 0 : i32
    return %c0_i32, %c0_i32_0 : i32, i32
  }
  func.func @transform_7(%arg0: i32) -> (i32, i32) {
    %c0_i32 = arith.constant 0 : i32
    %c0_i32_0 = arith.constant 0 : i32
    %c0_i32_1 = arith.constant 0 : i32
    return %c0_i32, %c0_i32_0 : i32, i32
  }
  func.func @transform_8(%arg0: i32) -> (i32, i32) {
    %c0_i32 = arith.constant 0 : i32
    %c0_i32_0 = arith.constant 0 : i32
    %c0_i32_1 = arith.constant 0 : i32
    return %c0_i32, %c0_i32_0 : i32, i32
  }
  func.func @transform_9(%arg0: i32) -> (i32, i32) {
    %c0_i32 = arith.constant 0 : i32
    %c0_i32_0 = arith.constant 0 : i32
    %c0_i32_1 = arith.constant 0 : i32
    return %c0_i32, %c0_i32_0 : i32, i32
  }
  func.func @transform_10(%arg0: i32) -> (i32, i32) {
    %c0_i32 = arith.constant 0 : i32
    %c0_i32_0 = arith.constant 0 : i32
    %c0_i32_1 = arith.constant 0 : i32
    return %c0_i32, %c0_i32_0 : i32, i32
  }
  func.func @transform_11(%arg0: i32) -> (i32, i32) {
    %c0_i32 = arith.constant 0 : i32
    %c0_i32_0 = arith.constant 0 : i32
    return %arg0, %c0_i32 : i32, i32
  }
}

</mosaic_0001>

<llo_original>
// kernel: tpu_custom_call.1
$region0: #{tpu_custom_call.1}
  #allocation0 [shape = 'u32[]', space=smem, size = 0x4, offset = 0x4, fixed_abs, tag = 'smem constant byte address 0x4 - core index']
  #allocation1 [shape = 'u32[144,128]{1,0:T(1,128)}', space=vmem, size = 0x12000, scoped, tag = 'internal scratch']
  %s0 = inlined_call_operand.hbm [shape: f32[32,128], index: 0, kind: input, shape index: {}]
  %s1 = inlined_call_operand.hbm [shape: f32[128,128], index: 1, kind: input, shape index: {}]
  %s2 = inlined_call_operand.hbm [shape: f32[128,256], index: 2, kind: input, shape index: {}]
  %s3 = inlined_call_operand.hbm [shape: f32[128,384], index: 3, kind: input, shape index: {}]
  %s4 = inlined_call_operand.hbm [shape: f32[128,384], index: 4, kind: input, shape index: {}]
  %s5 = inlined_call_operand.hbm [shape: f32[128,384], index: 5, kind: input, shape index: {}]
  %s6 = inlined_call_operand.hbm [shape: f32[128,256], index: 6, kind: input, shape index: {}]
  %s7 = inlined_call_operand.hbm [shape: f32[128,128], index: 7, kind: input, shape index: {}]
  %s8 = inlined_call_operand.vmem [shape: f32[3,128], index: 8, kind: input, shape index: {}]
  %s9 = inlined_call_operand.hbm [shape: f32[384,128], index: 9, kind: input, shape index: {}]
  %s10 = inlined_call_operand.vmem [shape: f32[1,128], index: 10, kind: input, shape index: {}]
  %s11 = inlined_call_operand.hbm [shape: f32[32,128], index: 11, kind: output, shape index: {}]
  %s12 = sld [smem:[#allocation0]]
  $region113: #{tpu_custom_call.1} parent=0
    _
  %s14 = ssub.s32 1, %s12
  %s15 = scalar_select 0, %s14, %s12
  $region1: #{tpu_custom_call.1} parent=0
    #allocation2 [shape = 'u8[16384]{0}', space=vmem, size = 0x4000, scoped, tag = 'input window, operand 0']
    #allocation3 [shape = 's32[2]{0}', space=sflag, size = 0x8, scoped, tag = 'scoped memory for tpu_custom_call.1']
    #allocation4 [shape = 's32[2]{0}', space=sflag, size = 0x8, scoped, tag = 'scoped memory for tpu_custom_call.1']
    #allocation5 [shape = 'u8[65536]{0}', space=vmem, size = 0x10000, scoped, tag = 'input window, operand 1, single buffered']
    #allocation6 [shape = 's32[1]{0}', space=sflag, size = 0x4, scoped, tag = 'scoped memory for tpu_custom_call.1']
    #allocation7 [shape = 'u8[131072]{0}', space=vmem, size = 0x20000, scoped, tag = 'input window, operand 2, single buffered']
    #allocation8 [shape = 'u8[196608]{0}', space=vmem, size = 0x30000, scoped, tag = 'input window, operand 3, single buffered']
    #allocation9 [shape = 's32[1]{0}', space=sflag, size = 0x4, scoped, tag = 'scoped memory for tpu_custom_call.1']
    #allocation10 [shape = 'u8[196608]{0}', space=vmem, size = 0x30000, scoped, tag = 'input window, operand 4, single buffered']
    #allocation11 [shape = 'u8[196608]{0}', space=vmem, size = 0x30000, scoped, tag = 'input window, operand 5, single buffered']
    #allocation12 [shape = 's32[1]{0}', space=sflag, size = 0x4, scoped, tag = 'scoped memory for tpu_custom_call.1']
    #allocation13 [shape = 'u8[131072]{0}', space=vmem, size = 0x20000, scoped, tag = 'input window, operand 6, single buffered']
    #allocation14 [shape = 'u8[65536]{0}', space=vmem, size = 0x10000, scoped, tag = 'input window, operand 7, single buffered']
    #allocation15 [shape = 's32[1]{0}', space=sflag, size = 0x4, scoped, tag = 'scoped memory for tpu_custom_call.1']
    #allocation16 [shape = 'u8[196608]{0}', space=vmem, size = 0x30000, scoped, tag = 'input window, operand 9, single buffered']
    #allocation17 [shape = 'u8[16384]{0}', space=vmem, size = 0x4000, scoped, tag = 'output window, operand 0']
    %16 = vsyncpa [#allocation3], 0
    %s17 = scalar_lea.sflag [#allocation3], 1
    %18 = vsyncpa %s17, 0
    %19 = vsyncpa [#allocation6], 0
    %20 = vsyncpa [#allocation9], 0
    %21 = vsyncpa [#allocation12], 0
    %22 = vsyncpa [#allocation15], 0
    %23 = vsyncpa [#allocation4], 0
    %s24 = scalar_lea.sflag [#allocation4], 1
    %25 = vsyncpa %s24, 0
    loop: start=0, step=1, limit=4
    $region2: #{tpu_custom_call.1} parent=1 // loop_pre_header
      _
    $region3: #{tpu_custom_call.1} parent=1 // loop_header
      %s27 = sphi 0, %s31
      %p28 = scmp.ge.s32.totalorder %s27, 4
      %s37 = sphi 0, %s39
      %s40 = sphi 0, %s37
      %s41 = sphi 0, %s40
      %s57 = sphi 0, %s41
      %s61 = sphi 0, %s61
      %s63 = sphi 0, %s61
      %s64 = sphi 0, %s63
      %s78 = sphi 0, %s64
      %s82 = sphi 0, %s82
      %s84 = sphi 0, %s82
      %s85 = sphi 0, %s84
      %s99 = sphi 0, %s85
      %s103 = sphi 0, %s103
      %s105 = sphi 0, %s103
      %s106 = sphi 0, %s105
      %s120 = sphi 0, %s106
      %s124 = sphi 0, %s124
      %s126 = sphi 0, %s124
      %s127 = sphi 0, %s126
      %s141 = sphi 0, %s127
      %s145 = sphi 0, %s145
      %s147 = sphi 0, %s145
      %s148 = sphi 0, %s147
      %s162 = sphi 0, %s148
      %s166 = sphi 0, %s166
      %s168 = sphi 0, %s166
      %s169 = sphi 0, %s168
      %s183 = sphi 0, %s169
      %s187 = sphi 0, %s187
      %s189 = sphi 0, %s187
      %s190 = sphi 0, %s189
      %s204 = sphi 0, %s190
      %s208 = sphi 0, %s208
      %s210 = sphi 0, %s208
      %s211 = sphi 0, %s210
      %s225 = sphi 0, %s211
      %s229 = sphi 0, %s229
      %s231 = sphi 0, %s229
      %s232 = sphi 0, %s231
      %s246 = sphi 0, %s232
      %s250 = sphi 0, %s250
      %s252 = sphi 0, %s250
      %s253 = sphi 0, %s252
      %s267 = sphi 0, %s253
      %s273 = sphi 0, %s275
      %s276 = sphi 0, %s273
      %s277 = sphi 0, %s276
      %s293 = sphi 0, %s277
    $region4: #{tpu_custom_call.1} parent=1 // loop_header_branch
      %30 = sbr.rel (%p28) target = $region8
    $region5: #{tpu_custom_call.1} parent=1 // loop_body
      %s32 = ssub.s32 %s27, 1
      %s33 = ssub.s32 %s27, 2
      %s34 = sadd.s32 %s27, 1
      %s35 = ssub.s32 %s27, %s34
      %p36 = scmp.eq.s32.totalorder %s35, 0
      %s38 = sadd.s32 %s37, 1
      %s39 = scalar_select %p36, %s37, %s38
      %p42 = pneg %p36
      %p43 = scmp.eq.s32.totalorder %s27, 1
      %p44 = por %p42, %p43
      %p45 = scmp.ne.s32.totalorder %s37, %s40
      %p46 = scmp.eq.s32.totalorder %s27, 0
      %p47 = por %p45, %p46
      %p48 = scmp.ne.s32.totalorder %s37, %s40
      %p49 = scmp.eq.s32.totalorder %s32, 1
      %p50 = por %p48, %p49
      %p51 = scmp.ne.s32.totalorder %s40, %s41
      %p52 = scmp.eq.s32.totalorder %s32, 0
      %p53 = por %p51, %p52
      %p54 = scmp.ne.s32.totalorder %s40, %s41
      %p55 = scmp.eq.s32.totalorder %s33, 1
      %p56 = por %p54, %p55
      %p58 = scmp.ne.s32.totalorder %s41, %s57
      %p59 = scmp.eq.s32.totalorder %s33, 0
      %p60 = por %p58, %p59
      %s62 = sadd.s32 %s61, 1
      %p65 = scmp.eq.s32.totalorder %s27, 1
      %p66 = scmp.ne.s32.totalorder %s61, %s63
      %p67 = scmp.eq.s32.totalorder %s27, 0
      %p68 = por %p66, %p67
      %p69 = scmp.ne.s32.totalorder %s61, %s63
      %p70 = scmp.eq.s32.totalorder %s32, 1
      %p71 = por %p69, %p70
      %p72 = scmp.ne.s32.totalorder %s63, %s64
      %p73 = scmp.eq.s32.totalorder %s32, 0
      %p74 = por %p72, %p73
      %p75 = scmp.ne.s32.totalorder %s63, %s64
      %p76 = scmp.eq.s32.totalorder %s33, 1
      %p77 = por %p75, %p76
      %p79 = scmp.ne.s32.totalorder %s64, %s78
      %p80 = scmp.eq.s32.totalorder %s33, 0
      %p81 = por %p79, %p80
      %s83 = sadd.s32 %s82, 1
      %p86 = scmp.eq.s32.totalorder %s27, 1
      %p87 = scmp.ne.s32.totalorder %s82, %s84
      %p88 = scmp.eq.s32.totalorder %s27, 0
      %p89 = por %p87, %p88
      %p90 = scmp.ne.s32.totalorder %s82, %s84
      %p91 = scmp.eq.s32.totalorder %s32, 1
      %p92 = por %p90, %p91
      %p93 = scmp.ne.s32.totalorder %s84, %s85
      %p94 = scmp.eq.s32.totalorder %s32, 0
      %p95 = por %p93, %p94
      %p96 = scmp.ne.s32.totalorder %s84, %s85
      %p97 = scmp.eq.s32.totalorder %s33, 1
      %p98 = por %p96, %p97
      %p100 = scmp.ne.s32.totalorder %s85, %s99
      %p101 = scmp.eq.s32.totalorder %s33, 0
      %p102 = por %p100, %p101
      %s104 = sadd.s32 %s103, 1
      %p107 = scmp.eq.s32.totalorder %s27, 1
      %p108 = scmp.ne.s32.totalorder %s103, %s105
      %p109 = scmp.eq.s32.totalorder %s27, 0
      %p110 = por %p108, %p109
      %p111 = scmp.ne.s32.totalorder %s103, %s105
      %p112 = scmp.eq.s32.totalorder %s32, 1
      %p113 = por %p111, %p112
      %p114 = scmp.ne.s32.totalorder %s105, %s106
      %p115 = scmp.eq.s32.totalorder %s32, 0
      %p116 = por %p114, %p115
      %p117 = scmp.ne.s32.totalorder %s105, %s106
      %p118 = scmp.eq.s32.totalorder %s33, 1
      %p119 = por %p117, %p118
      %p121 = scmp.ne.s32.totalorder %s106, %s120
      %p122 = scmp.eq.s32.totalorder %s33, 0
      %p123 = por %p121, %p122
      %s125 = sadd.s32 %s124, 1
      %p128 = scmp.eq.s32.totalorder %s27, 1
      %p129 = scmp.ne.s32.totalorder %s124, %s126
      %p130 = scmp.eq.s32.totalorder %s27, 0
      %p131 = por %p129, %p130
      %p132 = scmp.ne.s32.totalorder %s124, %s126
      %p133 = scmp.eq.s32.totalorder %s32, 1
      %p134 = por %p132, %p133
      %p135 = scmp.ne.s32.totalorder %s126, %s127
      %p136 = scmp.eq.s32.totalorder %s32, 0
      %p137 = por %p135, %p136
      %p138 = scmp.ne.s32.totalorder %s126, %s127
      %p139 = scmp.eq.s32.totalorder %s33, 1
      %p140 = por %p138, %p139
      %p142 = scmp.ne.s32.totalorder %s127, %s141
      %p143 = scmp.eq.s32.totalorder %s33, 0
      %p144 = por %p142, %p143
      %s146 = sadd.s32 %s145, 1
      %p149 = scmp.eq.s32.totalorder %s27, 1
      %p150 = scmp.ne.s32.totalorder %s145, %s147
      %p151 = scmp.eq.s32.totalorder %s27, 0
      %p152 = por %p150, %p151
      %p153 = scmp.ne.s32.totalorder %s145, %s147
      %p154 = scmp.eq.s32.totalorder %s32, 1
      %p155 = por %p153, %p154
      %p156 = scmp.ne.s32.totalorder %s147, %s148
      %p157 = scmp.eq.s32.totalorder %s32, 0
      %p158 = por %p156, %p157
      %p159 = scmp.ne.s32.totalorder %s147, %s148
      %p160 = scmp.eq.s32.totalorder %s33, 1
      %p161 = por %p159, %p160
      %p163 = scmp.ne.s32.totalorder %s148, %s162
      %p164 = scmp.eq.s32.totalorder %s33, 0
      %p165 = por %p163, %p164
      %s167 = sadd.s32 %s166, 1
      %p170 = scmp.eq.s32.totalorder %s27, 1
      %p171 = scmp.ne.s32.totalorder %s166, %s168
      %p172 = scmp.eq.s32.totalorder %s27, 0
      %p173 = por %p171, %p172
      %p174 = scmp.ne.s32.totalorder %s166, %s168
      %p175 = scmp.eq.s32.totalorder %s32, 1
      %p176 = por %p174, %p175
      %p177 = scmp.ne.s32.totalorder %s168, %s169
      %p178 = scmp.eq.s32.totalorder %s32, 0
      %p179 = por %p177, %p178
      %p180 = scmp.ne.s32.totalorder %s168, %s169
      %p181 = scmp.eq.s32.totalorder %s33, 1
      %p182 = por %p180, %p181
      %p184 = scmp.ne.s32.totalorder %s169, %s183
      %p185 = scmp.eq.s32.totalorder %s33, 0
      %p186 = por %p184, %p185
      %s188 = sadd.s32 %s187, 1
      %p191 = scmp.eq.s32.totalorder %s27, 1
      %p192 = scmp.ne.s32.totalorder %s187, %s189
      %p193 = scmp.eq.s32.totalorder %s27, 0
      %p194 = por %p192, %p193
      %p195 = scmp.ne.s32.totalorder %s187, %s189
      %p196 = scmp.eq.s32.totalorder %s32, 1
      %p197 = por %p195, %p196
      %p198 = scmp.ne.s32.totalorder %s189, %s190
      %p199 = scmp.eq.s32.totalorder %s32, 0
      %p200 = por %p198, %p199
      %p201 = scmp.ne.s32.totalorder %s189, %s190
      %p202 = scmp.eq.s32.totalorder %s33, 1
      %p203 = por %p201, %p202
      %p205 = scmp.ne.s32.totalorder %s190, %s204
      %p206 = scmp.eq.s32.totalorder %s33, 0
      %p207 = por %p205, %p206
      %s209 = sadd.s32 %s208, 1
      %p212 = scmp.eq.s32.totalorder %s27, 1
      %p213 = scmp.ne.s32.totalorder %s208, %s210
      %p214 = scmp.eq.s32.totalorder %s27, 0
      %p215 = por %p213, %p214
      %p216 = scmp.ne.s32.totalorder %s208, %s210
      %p217 = scmp.eq.s32.totalorder %s32, 1
      %p218 = por %p216, %p217
      %p219 = scmp.ne.s32.totalorder %s210, %s211
      %p220 = scmp.eq.s32.totalorder %s32, 0
      %p221 = por %p219, %p220
      %p222 = scmp.ne.s32.totalorder %s210, %s211
      %p223 = scmp.eq.s32.totalorder %s33, 1
      %p224 = por %p222, %p223
      %p226 = scmp.ne.s32.totalorder %s211, %s225
      %p227 = scmp.eq.s32.totalorder %s33, 0
      %p228 = por %p226, %p227
      %s230 = sadd.s32 %s229, 1
      %p233 = scmp.eq.s32.totalorder %s27, 1
      %p234 = scmp.ne.s32.totalorder %s229, %s231
      %p235 = scmp.eq.s32.totalorder %s27, 0
      %p236 = por %p234, %p235
      %p237 = scmp.ne.s32.totalorder %s229, %s231
      %p238 = scmp.eq.s32.totalorder %s32, 1
      %p239 = por %p237, %p238
      %p240 = scmp.ne.s32.totalorder %s231, %s232
      %p241 = scmp.eq.s32.totalorder %s32, 0
      %p242 = por %p240, %p241
      %p243 = scmp.ne.s32.totalorder %s231, %s232
      %p244 = scmp.eq.s32.totalorder %s33, 1
      %p245 = por %p243, %p244
      %p247 = scmp.ne.s32.totalorder %s232, %s246
      %p248 = scmp.eq.s32.totalorder %s33, 0
      %p249 = por %p247, %p248
      %s251 = sadd.s32 %s250, 1
      %p254 = scmp.eq.s32.totalorder %s27, 1
      %p255 = scmp.ne.s32.totalorder %s250, %s252
      %p256 = scmp.eq.s32.totalorder %s27, 0
      %p257 = por %p255, %p256
      %p258 = scmp.ne.s32.totalorder %s250, %s252
      %p259 = scmp.eq.s32.totalorder %s32, 1
      %p260 = por %p258, %p259
      %p261 = scmp.ne.s32.totalorder %s252, %s253
      %p262 = scmp.eq.s32.totalorder %s32, 0
      %p263 = por %p261, %p262
      %p264 = scmp.ne.s32.totalorder %s252, %s253
      %p265 = scmp.eq.s32.totalorder %s33, 1
      %p266 = por %p264, %p265
      %p268 = scmp.ne.s32.totalorder %s253, %s267
      %p269 = scmp.eq.s32.totalorder %s33, 0
      %p270 = por %p268, %p269
      %s271 = ssub.s32 %s27, %s34
      %p272 = scmp.eq.s32.totalorder %s271, 0
      %s274 = sadd.s32 %s273, 1
      %s275 = scalar_select %p272, %s273, %s274
      %p278 = pneg %p272
      %p279 = scmp.eq.s32.totalorder %s27, 1
      %p280 = por %p278, %p279
      %p281 = scmp.ne.s32.totalorder %s273, %s276
      %p282 = scmp.eq.s32.totalorder %s27, 0
      %p283 = por %p281, %p282
      %p284 = scmp.ne.s32.totalorder %s273, %s276
      %p285 = scmp.eq.s32.totalorder %s32, 1
      %p286 = por %p284, %p285
      %p287 = scmp.ne.s32.totalorder %s276, %s277
      %p288 = scmp.eq.s32.totalorder %s32, 0
      %p289 = por %p287, %p288
      %p290 = scmp.ne.s32.totalorder %s276, %s277
      %p291 = scmp.eq.s32.totalorder %s33, 1
      %p292 = por %p290, %p291
      %p294 = scmp.ne.s32.totalorder %s277, %s293
      %p295 = scmp.eq.s32.totalorder %s33, 0
      %p296 = por %p294, %p295
      %p297 = scmp.le.s32.totalorder 1, %s27
      %p298 = scmp.lt.s32.totalorder %s27, 3
      %p299 = pnand %p297, %p298
      %p300 = pneg %p299
      // Predicated region
      $region9: #{tpu_custom_call.1} parent=5 // pred_check
        _
      $region10: #{tpu_custom_call.1} parent=5 // pred_check_branch
        %302 = sbr.rel (%p299) target = $region12
      $region11: #{tpu_custom_call.1} parent=5 // pred_region
        %s303 = ssub.s32 %s27, 1
        // Predicated region
        $region13: #{tpu_custom_call.1} parent=11 // pred_check
          %p304 = pneg %p74
        $region14: #{tpu_custom_call.1} parent=11 // pred_check_branch
          %306 = sbr.rel (%p304) target = $region16
        $region15: #{tpu_custom_call.1} parent=11 // pred_region
          %s308 = ssub.s32 2048, 2048
          %309 = vsyncadd [#allocation6], %s308
          %s310 = sshll.u32 [#allocation5], 4
          %s311 = int_to_ptr.vmem [resolvable:$true] %s310
          %316 = dma.hbm_to_vmem [thread:$0]  %s1, 2048, %s311, [#allocation6], 128, 128, 8
        $region16: #{tpu_custom_call.1} parent=11 // pred_fallthru
          _
        // Predicated region
        $region17: #{tpu_custom_call.1} parent=11 // pred_check
          %p317 = pneg %p95
        $region18: #{tpu_custom_call.1} parent=11 // pred_check_branch
          %319 = sbr.rel (%p317) target = $region20
        $region19: #{tpu_custom_call.1} parent=11 // pred_region
          %s321 = ssub.s32 4096, 4096
          %322 = vsyncadd [#allocation6], %s321
          %s323 = sshll.u32 [#allocation7], 4
          %s324 = int_to_ptr.vmem [resolvable:$true] %s323
          %329 = dma.hbm_to_vmem [thread:$0]  %s2, 4096, %s324, [#allocation6], 256, 256, 16
        $region20: #{tpu_custom_call.1} parent=11 // pred_fallthru
          _
        // Predicated region
        $region21: #{tpu_custom_call.1} parent=11 // pred_check
          %p330 = pneg %p116
        $region22: #{tpu_custom_call.1} parent=11 // pred_check_branch
          %332 = sbr.rel (%p330) target = $region24
        $region23: #{tpu_custom_call.1} parent=11 // pred_region
          %s334 = ssub.s32 6144, 6144
          %335 = vsyncadd [#allocation9], %s334
          %s336 = sshll.u32 [#allocation8], 4
          %s337 = int_to_ptr.vmem [resolvable:$true] %s336
          %342 = dma.hbm_to_vmem [thread:$0]  %s3, 6144, %s337, [#allocation9], 384, 384, 24
        $region24: #{tpu_custom_call.1} parent=11 // pred_fallthru
          _
        // Predicated region
        $region25: #{tpu_custom_call.1} parent=11 // pred_check
          %p343 = pneg %p137
        $region26: #{tpu_custom_call.1} parent=11 // pred_check_branch
          %345 = sbr.rel (%p343) target = $region28
        $region27: #{tpu_custom_call.1} parent=11 // pred_region
          %s347 = ssub.s32 6144, 6144
          %348 = vsyncadd [#allocation9], %s347
          %s349 = sshll.u32 [#allocation10], 4
          %s350 = int_to_ptr.vmem [resolvable:$true] %s349
          %355 = dma.hbm_to_vmem [thread:$0]  %s4, 6144, %s350, [#allocation9], 384, 384, 24
        $region28: #{tpu_custom_call.1} parent=11 // pred_fallthru
          _
        // Predicated region
        $region29: #{tpu_custom_call.1} parent=11 // pred_check
          %p356 = pneg %p158
        $region30: #{tpu_custom_call.1} parent=11 // pred_check_branch
          %358 = sbr.rel (%p356) target = $region32
        $region31: #{tpu_custom_call.1} parent=11 // pred_region
          %s360 = ssub.s32 6144, 6144
          %361 = vsyncadd [#allocation12], %s360
          %s362 = sshll.u32 [#allocation11], 4
          %s363 = int_to_ptr.vmem [resolvable:$true] %s362
          %368 = dma.hbm_to_vmem [thread:$0]  %s5, 6144, %s363, [#allocation12], 384, 384, 24
        $region32: #{tpu_custom_call.1} parent=11 // pred_fallthru
          _
        // Predicated region
        $region33: #{tpu_custom_call.1} parent=11 // pred_check
          %p369 = pneg %p179
        $region34: #{tpu_custom_call.1} parent=11 // pred_check_branch
          %371 = sbr.rel (%p369) target = $region36
        $region35: #{tpu_custom_call.1} parent=11 // pred_region
          %s373 = ssub.s32 4096, 4096
          %374 = vsyncadd [#allocation12], %s373
          %s375 = sshll.u32 [#allocation13], 4
          %s376 = int_to_ptr.vmem [resolvable:$true] %s375
          %381 = dma.hbm_to_vmem [thread:$0]  %s6, 4096, %s376, [#allocation12], 256, 256, 16
        $region36: #{tpu_custom_call.1} parent=11 // pred_fallthru
          _
        // Predicated region
        $region37: #{tpu_custom_call.1} parent=11 // pred_check
          %p382 = pneg %p200
        $region38: #{tpu_custom_call.1} parent=11 // pred_check_branch
          %384 = sbr.rel (%p382) target = $region40
        $region39: #{tpu_custom_call.1} parent=11 // pred_region
          %s386 = ssub.s32 2048, 2048
          %387 = vsyncadd [#allocation15], %s386
          %s388 = sshll.u32 [#allocation14], 4
          %s389 = int_to_ptr.vmem [resolvable:$true] %s388
          %394 = dma.hbm_to_vmem [thread:$0]  %s7, 2048, %s389, [#allocation15], 128, 128, 8
        $region40: #{tpu_custom_call.1} parent=11 // pred_fallthru
          _
        // Predicated region
        $region41: #{tpu_custom_call.1} parent=11 // pred_check
          %p395 = pneg %p221
        $region42: #{tpu_custom_call.1} parent=11 // pred_check_branch
          %397 = sbr.rel (%p395) target = $region44
        $region43: #{tpu_custom_call.1} parent=11 // pred_region
          _
        $region44: #{tpu_custom_call.1} parent=11 // pred_fallthru
          _
        // Predicated region
        $region45: #{tpu_custom_call.1} parent=11 // pred_check
          %p398 = pneg %p242
        $region46: #{tpu_custom_call.1} parent=11 // pred_check_branch
          %400 = sbr.rel (%p398) target = $region48
        $region47: #{tpu_custom_call.1} parent=11 // pred_region
          %s402 = ssub.s32 6144, 6144
          %403 = vsyncadd [#allocation15], %s402
          %s404 = sshll.u32 [#allocation16], 4
          %s405 = int_to_ptr.vmem [resolvable:$true] %s404
          %410 = dma.hbm_to_vmem [thread:$0]  %s9, 6144, %s405, [#allocation15], 128, 128, 8
        $region48: #{tpu_custom_call.1} parent=11 // pred_fallthru
          _
        // Predicated region
        $region49: #{tpu_custom_call.1} parent=11 // pred_check
          %p411 = pneg %p263
        $region50: #{tpu_custom_call.1} parent=11 // pred_check_branch
          %413 = sbr.rel (%p411) target = $region52
        $region51: #{tpu_custom_call.1} parent=11 // pred_region
          _
        $region52: #{tpu_custom_call.1} parent=11 // pred_fallthru
          _
      $region12: #{tpu_custom_call.1} parent=5 // pred_fallthru
        _
      %p414 = scmp.lt.s32.totalorder %s27, 2
      // Predicated region
      $region53: #{tpu_custom_call.1} parent=5 // pred_check
        %p415 = pneg %p414
      $region54: #{tpu_custom_call.1} parent=5 // pred_check_branch
        %417 = sbr.rel (%p415) target = $region56
      $region55: #{tpu_custom_call.1} parent=5 // pred_region
        // Predicated region
        $region57: #{tpu_custom_call.1} parent=55 // pred_check
          %p418 = pneg %p47
        $region58: #{tpu_custom_call.1} parent=55 // pred_check_branch
          %420 = sbr.rel (%p418) target = $region60
        $region59: #{tpu_custom_call.1} parent=55 // pred_region
          %s421 = sand.u32 %s37, 1
          %s422 = scalar_lea.sflag [#allocation3], %s421
          %s423 = sand.u32 %s37, 1
          %s424 = smul.addr %s423, 16
          %s425 = scalar_lea.vmem [#allocation2], %s424
          %s426 = smul.u32 2, %s27
          %s428 = ssub.s32 256, 256
          %429 = vsyncadd %s422, %s428
          %s430 = smul.addr %s426, 128
          %s431 = scalar_lea.hbm %s0, %s430
          %s432 = sshll.u32 %s425, 4
          %s433 = int_to_ptr.vmem [resolvable:$true] %s432
          %438 = dma.hbm_to_vmem [thread:$0]  %s431, 256, %s433, %s422, 128, 128, 8
        $region60: #{tpu_custom_call.1} parent=55 // pred_fallthru
          _
      $region56: #{tpu_custom_call.1} parent=5 // pred_fallthru
        _
      %p439 = scmp.le.s32.totalorder 1, %s27
      %p440 = scmp.lt.s32.totalorder %s27, 3
      %p441 = pnand %p439, %p440
      %p442 = pneg %p441
      // Predicated region
      $region61: #{tpu_custom_call.1} parent=5 // pred_check
        _
      $region62: #{tpu_custom_call.1} parent=5 // pred_check_branch
        %444 = sbr.rel (%p441) target = $region64
      $region63: #{tpu_custom_call.1} parent=5 // pred_region
        %s445 = ssub.s32 %s27, 1
        %s446 = sand.u32 %s40, 1
        %s447 = scalar_lea.sflag [#allocation3], %s446
        %s448 = sand.u32 %s40, 1
        %s449 = smul.addr %s448, 16
        %s450 = scalar_lea.vmem [#allocation2], %s449
        // Predicated region
        $region65: #{tpu_custom_call.1} parent=63 // pred_check
          %p451 = pneg %p53
        $region66: #{tpu_custom_call.1} parent=63 // pred_check_branch
          %453 = sbr.rel (%p451) target = $region68
        $region67: #{tpu_custom_call.1} parent=63 // pred_region
          %454 = dma.done %s447, 256
        $region68: #{tpu_custom_call.1} parent=63 // pred_fallthru
          _
        // Predicated region
        $region69: #{tpu_custom_call.1} parent=63 // pred_check
          %p455 = pneg %p74
        $region70: #{tpu_custom_call.1} parent=63 // pred_check_branch
          %457 = sbr.rel (%p455) target = $region72
        $region71: #{tpu_custom_call.1} parent=63 // pred_region
          %458 = dma.done [#allocation6], 2048
        $region72: #{tpu_custom_call.1} parent=63 // pred_fallthru
          _
        // Predicated region
        $region73: #{tpu_custom_call.1} parent=63 // pred_check
          %p459 = pneg %p95
        $region74: #{tpu_custom_call.1} parent=63 // pred_check_branch
          %461 = sbr.rel (%p459) target = $region76
        $region75: #{tpu_custom_call.1} parent=63 // pred_region
          %462 = dma.done [#allocation6], 4096
        $region76: #{tpu_custom_call.1} parent=63 // pred_fallthru
          _
        // Predicated region
        $region77: #{tpu_custom_call.1} parent=63 // pred_check
          %p463 = pneg %p116
        $region78: #{tpu_custom_call.1} parent=63 // pred_check_branch
          %465 = sbr.rel (%p463) target = $region80
        $region79: #{tpu_custom_call.1} parent=63 // pred_region
          %466 = dma.done [#allocation9], 6144
        $region80: #{tpu_custom_call.1} parent=63 // pred_fallthru
          _
        // Predicated region
        $region81: #{tpu_custom_call.1} parent=63 // pred_check
          %p467 = pneg %p137
        $region82: #{tpu_custom_call.1} parent=63 // pred_check_branch
          %469 = sbr.rel (%p467) target = $region84
        $region83: #{tpu_custom_call.1} parent=63 // pred_region
          %470 = dma.done [#allocation9], 6144
        $region84: #{tpu_custom_call.1} parent=63 // pred_fallthru
          _
        // Predicated region
        $region85: #{tpu_custom_call.1} parent=63 // pred_check
          %p471 = pneg %p158
        $region86: #{tpu_custom_call.1} parent=63 // pred_check_branch
          %473 = sbr.rel (%p471) target = $region88
        $region87: #{tpu_custom_call.1} parent=63 // pred_region
          %474 = dma.done [#allocation12], 6144
        $region88: #{tpu_custom_call.1} parent=63 // pred_fallthru
          _
        // Predicated region
        $region89: #{tpu_custom_call.1} parent=63 // pred_check
          %p475 = pneg %p179
        $region90: #{tpu_custom_call.1} parent=63 // pred_check_branch
          %477 = sbr.rel (%p475) target = $region92
        $region91: #{tpu_custom_call.1} parent=63 // pred_region
          %478 = dma.done [#allocation12], 4096
        $region92: #{tpu_custom_call.1} parent=63 // pred_fallthru
          _
        // Predicated region
        $region93: #{tpu_custom_call.1} parent=63 // pred_check
          %p479 = pneg %p200
        $region94: #{tpu_custom_call.1} parent=63 // pred_check_branch
          %481 = sbr.rel (%p479) target = $region96
        $region95: #{tpu_custom_call.1} parent=63 // pred_region
          %482 = dma.done [#allocation15], 2048
        $region96: #{tpu_custom_call.1} parent=63 // pred_fallthru
          _
        // Predicated region
        $region97: #{tpu_custom_call.1} parent=63 // pred_check
          %p483 = pneg %p242
        $region98: #{tpu_custom_call.1} parent=63 // pred_check_branch
          %485 = sbr.rel (%p483) target = $region100
        $region99: #{tpu_custom_call.1} parent=63 // pred_region
          %486 = dma.done [#allocation15], 6144
        $region100: #{tpu_custom_call.1} parent=63 // pred_fallthru
          _
        %s487 = sand.u32 %s40, 1
        %s488 = scalar_lea.sflag [#allocation3], %s487
        %s489 = sand.u32 %s40, 1
        %s490 = smul.addr %s489, 16
        %s491 = scalar_lea.vmem [#allocation2], %s490
        %p492 = pneg %p53
        %p493 = pneg %p50
        %p494 = pneg %p74
        %p495 = pneg %p71
        %p496 = pneg %p95
        %p497 = pneg %p92
        %p498 = pneg %p116
        %p499 = pneg %p113
        %p500 = pneg %p137
        %p501 = pneg %p134
        %p502 = pneg %p158
        %p503 = pneg %p155
        %p504 = pneg %p179
        %p505 = pneg %p176
        %p506 = pneg %p200
        %p507 = pneg %p197
        %p508 = pneg %p221
        %p509 = pneg %p218
        %p510 = pneg %p242
        %p511 = pneg %p239
        %p512 = pneg %p263
        %p513 = pneg %p260
        %p514 = pneg %p289
        %p515 = pneg %p286
        %s516 = sand.u32 %s276, 1
        %s517 = scalar_lea.sflag [#allocation4], %s516
        %s518 = sand.u32 %s276, 1
        %s519 = smul.addr %s518, 16
        %s520 = scalar_lea.vmem [#allocation17], %s519
        %s521 = smul.u32 2, %s32
        %s522 = smul.u32 2, %s32
        %v523 = vld [vmem:[%s450] sm:$0xff]
        %v524 = vld [vmem:[%s450 + $0x8] sm:$0xff]
        %v525 = vld [vmem:[%s8] sm:$0x7]
        %v526 = vld [vmem:[#allocation16] sm:$0xff]
        %v527 = vld [vmem:[#allocation16 + $0x8] sm:$0xff]
        %v528 = vld [vmem:[#allocation16 + $0x10] sm:$0xff]
        %v529 = vld [vmem:[#allocation16 + $0x18] sm:$0xff]
        %v530 = vld [vmem:[#allocation16 + $0x20] sm:$0xff]
        %v531 = vld [vmem:[#allocation16 + $0x28] sm:$0xff]
        %v532 = vld [vmem:[#allocation16 + $0x30] sm:$0xff]
        %v533 = vld [vmem:[#allocation16 + $0x38] sm:$0xff]
        %v534 = vld [vmem:[#allocation16 + $0x40] sm:$0xff]
        %v535 = vld [vmem:[#allocation16 + $0x48] sm:$0xff]
        %v536 = vld [vmem:[#allocation16 + $0x50] sm:$0xff]
        %v537 = vld [vmem:[#allocation16 + $0x58] sm:$0xff]
        %v538 = vld [vmem:[#allocation16 + $0x60] sm:$0xff]
        %v539 = vld [vmem:[#allocation16 + $0x68] sm:$0xff]
        %v540 = vld [vmem:[#allocation16 + $0x70] sm:$0xff]
        %v541 = vld [vmem:[#allocation16 + $0x78] sm:$0xff]
        %v542 = vld [vmem:[#allocation16 + $0x80] sm:$0xff]
        %v543 = vld [vmem:[#allocation16 + $0x88] sm:$0xff]
        %v544 = vld [vmem:[#allocation16 + $0x90] sm:$0xff]
        %v545 = vld [vmem:[#allocation16 + $0x98] sm:$0xff]
        %v546 = vld [vmem:[#allocation16 + $0xa0] sm:$0xff]
        %v547 = vld [vmem:[#allocation16 + $0xa8] sm:$0xff]
        %v548 = vld [vmem:[#allocation16 + $0xb0] sm:$0xff]
        %v549 = vld [vmem:[#allocation16 + $0xb8] sm:$0xff]
        %v550 = vld [vmem:[#allocation16 + $0xc0] sm:$0xff]
        %v551 = vld [vmem:[#allocation16 + $0xc8] sm:$0xff]
        %v552 = vld [vmem:[#allocation16 + $0xd0] sm:$0xff]
        %v553 = vld [vmem:[#allocation16 + $0xd8] sm:$0xff]
        %v554 = vld [vmem:[#allocation16 + $0xe0] sm:$0xff]
        %v555 = vld [vmem:[#allocation16 + $0xe8] sm:$0xff]
        %v556 = vld [vmem:[#allocation16 + $0xf0] sm:$0xff]
        %v557 = vld [vmem:[#allocation16 + $0xf8] sm:$0xff]
        %v558 = vld [vmem:[#allocation16 + $0x100] sm:$0xff]
        %v559 = vld [vmem:[#allocation16 + $0x108] sm:$0xff]
        %v560 = vld [vmem:[#allocation16 + $0x110] sm:$0xff]
        %v561 = vld [vmem:[#allocation16 + $0x118] sm:$0xff]
        %v562 = vld [vmem:[#allocation16 + $0x120] sm:$0xff]
        %v563 = vld [vmem:[#allocation16 + $0x128] sm:$0xff]
        %v564 = vld [vmem:[#allocation16 + $0x130] sm:$0xff]
        %v565 = vld [vmem:[#allocation16 + $0x138] sm:$0xff]
        %v566 = vld [vmem:[#allocation16 + $0x140] sm:$0xff]
        %v567 = vld [vmem:[#allocation16 + $0x148] sm:$0xff]
        %v568 = vld [vmem:[#allocation16 + $0x150] sm:$0xff]
        %v569 = vld [vmem:[#allocation16 + $0x158] sm:$0xff]
        %v570 = vld [vmem:[#allocation16 + $0x160] sm:$0xff]
        %v571 = vld [vmem:[#allocation16 + $0x168] sm:$0xff]
        %v572 = vld [vmem:[#allocation16 + $0x170] sm:$0xff]
        %v573 = vld [vmem:[#allocation16 + $0x178] sm:$0xff]
        %v574 = vld [vmem:[#allocation5] sm:$0xff]
        %v575 = vld [vmem:[#allocation5 + $0x8] sm:$0xff]
        %v576 = vld [vmem:[#allocation5 + $0x10] sm:$0xff]
        %v577 = vld [vmem:[#allocation5 + $0x18] sm:$0xff]
        %v578 = vld [vmem:[#allocation5 + $0x20] sm:$0xff]
        %v579 = vld [vmem:[#allocation5 + $0x28] sm:$0xff]
        %v580 = vld [vmem:[#allocation5 + $0x30] sm:$0xff]
        %v581 = vld [vmem:[#allocation5 + $0x38] sm:$0xff]
        %v582 = vld [vmem:[#allocation5 + $0x40] sm:$0xff]
        %v583 = vld [vmem:[#allocation5 + $0x48] sm:$0xff]
        %v584 = vld [vmem:[#allocation5 + $0x50] sm:$0xff]
        %v585 = vld [vmem:[#allocation5 + $0x58] sm:$0xff]
        %v586 = vld [vmem:[#allocation5 + $0x60] sm:$0xff]
        %v587 = vld [vmem:[#allocation5 + $0x68] sm:$0xff]
        %v588 = vld [vmem:[#allocation5 + $0x70] sm:$0xff]
        %v589 = vld [vmem:[#allocation5 + $0x78] sm:$0xff]
        %590 = vmatprep.subr.mxu0 0.0
        %591 = vmatpush1.msra.mxu0 %v574
        %592 = vmatprep.subr.mxu0 0.0
        %593 = vmatpush1.msra.mxu0 %v575
        %594 = vmatprep.subr.mxu0 0.0
        %595 = vmatpush1.msra.mxu0 %v576
        %596 = vmatprep.subr.mxu0 0.0
        %597 = vmatpush1.msra.mxu0 %v577
        %598 = vmatprep.subr.mxu0 0.0
        %599 = vmatpush1.msra.mxu0 %v578
        %600 = vmatprep.subr.mxu0 0.0
        %601 = vmatpush1.msra.mxu0 %v579
        %602 = vmatprep.subr.mxu0 0.0
        %603 = vmatpush1.msra.mxu0 %v580
        %604 = vmatprep.subr.mxu0 0.0
        %605 = vmatpush1.msra.mxu0 %v581
        %606 = vmatprep.subr.mxu0 0.0
        %607 = vmatpush1.msra.mxu0 %v582
        %608 = vmatprep.subr.mxu0 0.0
        %609 = vmatpush1.msra.mxu0 %v583
        %610 = vmatprep.subr.mxu0 0.0
        %611 = vmatpush1.msra.mxu0 %v584
        %612 = vmatprep.subr.mxu0 0.0
        %613 = vmatpush1.msra.mxu0 %v585
        %614 = vmatprep.subr.mxu0 0.0
        %615 = vmatpush1.msra.mxu0 %v586
        %616 = vmatprep.subr.mxu0 0.0
        %617 = vmatpush1.msra.mxu0 %v587
        %618 = vmatprep.subr.mxu0 0.0
        %619 = vmatpush1.msra.mxu0 %v588
        %620 = vmatprep.subr.mxu0 0.0
        %621 = vmatpush1.msra.mxu0 %v589
        %622 = vmatprep.subr.mxu0 0.0
        %623 = vmatpush1.msra.mxu0 0.0
        %624 = vmatprep.subr.mxu0 0.0
        %625 = vmatpush1.msra.mxu0 0.0
        %626 = vmatprep.subr.mxu0 0.0
        %627 = vmatpush1.msra.mxu0 0.0
        %628 = vmatprep.subr.mxu0 0.0
        %629 = vmatpush1.msra.mxu0 0.0
        %630 = vmatprep.subr.mxu0 0.0
        %631 = vmatpush1.msra.mxu0 0.0
        %632 = vmatprep.subr.mxu0 0.0
        %633 = vmatpush1.msra.mxu0 0.0
        %634 = vmatprep.subr.mxu0 0.0
        %635 = vmatpush1.msra.mxu0 0.0
        %636 = vmatprep.subr.mxu0 0.0
        %637 = vmatpush1.msra.mxu0 0.0
        %638 = vmatprep.subr.mxu0 0.0
        %639 = vmatpush1.msra.mxu0 0.0
        %640 = vmatprep.subr.mxu0 0.0
        %641 = vmatpush1.msra.mxu0 0.0
        %642 = vmatprep.subr.mxu0 0.0
        %643 = vmatpush1.msra.mxu0 0.0
        %644 = vmatprep.subr.mxu0 0.0
        %645 = vmatpush1.msra.mxu0 0.0
        %646 = vmatprep.subr.mxu0 0.0
        %647 = vmatpush1.msra.mxu0 0.0
        %648 = vmatprep.subr.mxu0 0.0
        %649 = vmatpush1.msra.mxu0 0.0
        %650 = vmatprep.subr.mxu0 0.0
        %651 = vmatpush1.msra.mxu0 0.0
        %652 = vmatprep.subr.mxu0 0.0
        %653 = vmatpush1.msra.mxu0 0.0
        %654 = vmatprep.mubr.f32.mxu0 0.0
        %655 = vmatmul.mubr.f32.gmra.mrb[0].mxu0 %v523
        %v656 = vpop.f32.mrb[0].mxu0
        %v657 = vadd.f32 0.0, %v656
        %v658 = vpop.f32.mrb[0].mxu0
        %659 = vmatprep.mubr.f32.mxu0 0.0
        %660 = vmatmul.mubr.f32.gmra.mrb[0].mxu0 %v524
        %v661 = vpop.f32.mrb[0].mxu0
        %v662 = vadd.f32 0.0, %v661
        %v663 = vpop.f32.mrb[0].mxu0
        %664 = vdwg.mxu0
        %v665 = vrot.slane %v657, 5
        %v666 = vrot.slane %v662, 5
        %v667 = vlaneseq
        %v668 = vshrl.u32 %v667, 7
        %vm669 = vcmp.lt.s32.totalorder %v668, 3
        %v670 = vsel %vm669, %v665, %v666
        %v671 = vsel %vm669, %v666, %v665
        %v672 = vld [vmem:[#allocation7] sm:$0xff]
        %v673 = vld [vmem:[#allocation7 + $0x8] sm:$0xff]
        %v674 = vld [vmem:[#allocation7 + $0x10] sm:$0xff]
        %v675 = vld [vmem:[#allocation7 + $0x18] sm:$0xff]
        %v676 = vld [vmem:[#allocation7 + $0x20] sm:$0xff]
        %v677 = vld [vmem:[#allocation7 + $0x28] sm:$0xff]
        %v678 = vld [vmem:[#allocation7 + $0x30] sm:$0xff]
        %v679 = vld [vmem:[#allocation7 + $0x38] sm:$0xff]
        %v680 = vld [vmem:[#allocation7 + $0x40] sm:$0xff]
        %v681 = vld [vmem:[#allocation7 + $0x48] sm:$0xff]
        %v682 = vld [vmem:[#allocation7 + $0x50] sm:$0xff]
        %v683 = vld [vmem:[#allocation7 + $0x58] sm:$0xff]
        %v684 = vld [vmem:[#allocation7 + $0x60] sm:$0xff]
        %v685 = vld [vmem:[#allocation7 + $0x68] sm:$0xff]
        %v686 = vld [vmem:[#allocation7 + $0x70] sm:$0xff]
        %v687 = vld [vmem:[#allocation7 + $0x78] sm:$0xff]
        %v688 = vld [vmem:[#allocation7 + $0x80] sm:$0xff]
        %v689 = vld [vmem:[#allocation7 + $0x88] sm:$0xff]
        %v690 = vld [vmem:[#allocation7 + $0x90] sm:$0xff]
        %v691 = vld [vmem:[#allocation7 + $0x98] sm:$0xff]
        %v692 = vld [vmem:[#allocation7 + $0xa0] sm:$0xff]
        %v693 = vld [vmem:[#allocation7 + $0xa8] sm:$0xff]
        %v694 = vld [vmem:[#allocation7 + $0xb0] sm:$0xff]
        %v695 = vld [vmem:[#allocation7 + $0xb8] sm:$0xff]
        %v696 = vld [vmem:[#allocation7 + $0xc0] sm:$0xff]
        %v697 = vld [vmem:[#allocation7 + $0xc8] sm:$0xff]
        %v698 = vld [vmem:[#allocation7 + $0xd0] sm:$0xff]
        %v699 = vld [vmem:[#allocation7 + $0xd8] sm:$0xff]
        %v700 = vld [vmem:[#allocation7 + $0xe0] sm:$0xff]
        %v701 = vld [vmem:[#allocation7 + $0xe8] sm:$0xff]
        %v702 = vld [vmem:[#allocation7 + $0xf0] sm:$0xff]
        %v703 = vld [vmem:[#allocation7 + $0xf8] sm:$0xff]
        %704 = vmatprep.subr.mxu0 %v673
        %705 = vmatpush1.msra.mxu0 %v672
        %706 = vmatprep.subr.mxu0 %v675
        %707 = vmatpush1.msra.mxu0 %v674
        %708 = vmatprep.subr.mxu0 %v677
        %709 = vmatpush1.msra.mxu0 %v676
        %710 = vmatprep.subr.mxu0 %v679
        %711 = vmatpush1.msra.mxu0 %v678
        %712 = vmatprep.subr.mxu0 %v681
        %713 = vmatpush1.msra.mxu0 %v680
        %714 = vmatprep.subr.mxu0 %v683
        %715 = vmatpush1.msra.mxu0 %v682
        %716 = vmatprep.subr.mxu0 %v685
        %717 = vmatpush1.msra.mxu0 %v684
        %718 = vmatprep.subr.mxu0 %v687
        %719 = vmatpush1.msra.mxu0 %v686
        %720 = vmatprep.subr.mxu0 %v689
        %721 = vmatpush1.msra.mxu0 %v688
        %722 = vmatprep.subr.mxu0 %v691
        %723 = vmatpush1.msra.mxu0 %v690
        %724 = vmatprep.subr.mxu0 %v693
        %725 = vmatpush1.msra.mxu0 %v692
        %726 = vmatprep.subr.mxu0 %v695
        %727 = vmatpush1.msra.mxu0 %v694
        %728 = vmatprep.subr.mxu0 %v697
        %729 = vmatpush1.msra.mxu0 %v696
        %730 = vmatprep.subr.mxu0 %v699
        %731 = vmatpush1.msra.mxu0 %v698
        %732 = vmatprep.subr.mxu0 %v701
        %733 = vmatpush1.msra.mxu0 %v700
        %734 = vmatprep.subr.mxu0 %v703
        %735 = vmatpush1.msra.mxu0 %v702
        %736 = vmatprep.subr.mxu0 0.0
        %737 = vmatpush1.msra.mxu0 0.0
        %738 = vmatprep.subr.mxu0 0.0
        %739 = vmatpush1.msra.mxu0 0.0
        %740 = vmatprep.subr.mxu0 0.0
        %741 = vmatpush1.msra.mxu0 0.0
        %742 = vmatprep.subr.mxu0 0.0
        %743 = vmatpush1.msra.mxu0 0.0
        %744 = vmatprep.subr.mxu0 0.0
        %745 = vmatpush1.msra.mxu0 0.0
        %746 = vmatprep.subr.mxu0 0.0
        %747 = vmatpush1.msra.mxu0 0.0
        %748 = vmatprep.subr.mxu0 0.0
        %749 = vmatpush1.msra.mxu0 0.0
        %750 = vmatprep.subr.mxu0 0.0
        %751 = vmatpush1.msra.mxu0 0.0
        %752 = vmatprep.subr.mxu0 0.0
        %753 = vmatpush1.msra.mxu0 0.0
        %754 = vmatprep.subr.mxu0 0.0
        %755 = vmatpush1.msra.mxu0 0.0
        %756 = vmatprep.subr.mxu0 0.0
        %757 = vmatpush1.msra.mxu0 0.0
        %758 = vmatprep.subr.mxu0 0.0
        %759 = vmatpush1.msra.mxu0 0.0
        %760 = vmatprep.subr.mxu0 0.0
        %761 = vmatpush1.msra.mxu0 0.0
        %762 = vmatprep.subr.mxu0 0.0
        %763 = vmatpush1.msra.mxu0 0.0
        %764 = vmatprep.subr.mxu0 0.0
        %765 = vmatpush1.msra.mxu0 0.0
        %766 = vmatprep.subr.mxu0 0.0
        %767 = vmatpush1.msra.mxu0 0.0
        %768 = vmatprep.mubr.f32.mxu0 0.0
        %769 = vmatmul.mubr.f32.gmra.mrb[0].mxu0 %v523
        %v770 = vpop.f32.mrb[0].mxu0
        %v771 = vadd.f32 0.0, %v770
        %v772 = vpop.f32.mrb[0].mxu0
        %v773 = vadd.f32 0.0, %v772
        %774 = vmatprep.mubr.f32.mxu0 0.0
        %775 = vmatmul.mubr.f32.gmra.mrb[0].mxu0 %v524
        %v776 = vpop.f32.mrb[0].mxu0
        %v777 = vadd.f32 0.0, %v776
        %v778 = vpop.f32.mrb[0].mxu0
        %v779 = vadd.f32 0.0, %v778
        %780 = vdwg.mxu0
        %v781 = vrot.slane %v771, 6
        %v782 = vrot.slane %v773, 6
        %v783 = vrot.slane %v777, 6
        %v784 = vrot.slane %v779, 6
        %vm785 = vcmp.lt.s32.totalorder %v668, 2
        %v786 = vsel %vm785, %v781, %v783
        %v787 = vsel %vm785, %v782, %v784
        %v788 = vsel %vm785, %v783, %v781
        %v789 = vsel %vm785, %v784, %v782
        %v790 = vadd.f32 %v671, %v789
        %v791 = vadd.f32 %v670, %v787
        %v792 = vld [vmem:[#allocation8] sm:$0xff]
        %v793 = vld [vmem:[#allocation8 + $0x8] sm:$0xff]
        %v794 = vld [vmem:[#allocation8 + $0x10] sm:$0xff]
        %v795 = vld [vmem:[#allocation8 + $0x18] sm:$0xff]
        %v796 = vld [vmem:[#allocation8 + $0x20] sm:$0xff]
        %v797 = vld [vmem:[#allocation8 + $0x28] sm:$0xff]
        %v798 = vld [vmem:[#allocation8 + $0x30] sm:$0xff]
        %v799 = vld [vmem:[#allocation8 + $0x38] sm:$0xff]
        %v800 = vld [vmem:[#allocation8 + $0x40] sm:$0xff]
        %v801 = vld [vmem:[#allocation8 + $0x48] sm:$0xff]
        %v802 = vld [vmem:[#allocation8 + $0x50] sm:$0xff]
        %v803 = vld [vmem:[#allocation8 + $0x58] sm:$0xff]
        %v804 = vld [vmem:[#allocation8 + $0x60] sm:$0xff]
        %v805 = vld [vmem:[#allocation8 + $0x68] sm:$0xff]
        %v806 = vld [vmem:[#allocation8 + $0x70] sm:$0xff]
        %v807 = vld [vmem:[#allocation8 + $0x78] sm:$0xff]
        %v808 = vld [vmem:[#allocation8 + $0x80] sm:$0xff]
        %v809 = vld [vmem:[#allocation8 + $0x88] sm:$0xff]
        %v810 = vld [vmem:[#allocation8 + $0x90] sm:$0xff]
        %v811 = vld [vmem:[#allocation8 + $0x98] sm:$0xff]
        %v812 = vld [vmem:[#allocation8 + $0xa0] sm:$0xff]
        %v813 = vld [vmem:[#allocation8 + $0xa8] sm:$0xff]
        %v814 = vld [vmem:[#allocation8 + $0xb0] sm:$0xff]
        %v815 = vld [vmem:[#allocation8 + $0xb8] sm:$0xff]
        %v816 = vld [vmem:[#allocation8 + $0xc0] sm:$0xff]
        %v817 = vld [vmem:[#allocation8 + $0xc8] sm:$0xff]
        %v818 = vld [vmem:[#allocation8 + $0xd0] sm:$0xff]
        %v819 = vld [vmem:[#allocation8 + $0xd8] sm:$0xff]
        %v820 = vld [vmem:[#allocation8 + $0xe0] sm:$0xff]
        %v821 = vld [vmem:[#allocation8 + $0xe8] sm:$0xff]
        %v822 = vld [vmem:[#allocation8 + $0xf0] sm:$0xff]
        %v823 = vld [vmem:[#allocation8 + $0xf8] sm:$0xff]
        %v824 = vld [vmem:[#allocation8 + $0x100] sm:$0xff]
        %v825 = vld [vmem:[#allocation8 + $0x108] sm:$0xff]
        %v826 = vld [vmem:[#allocation8 + $0x110] sm:$0xff]
        %v827 = vld [vmem:[#allocation8 + $0x118] sm:$0xff]
        %v828 = vld [vmem:[#allocation8 + $0x120] sm:$0xff]
        %v829 = vld [vmem:[#allocation8 + $0x128] sm:$0xff]
        %v830 = vld [vmem:[#allocation8 + $0x130] sm:$0xff]
        %v831 = vld [vmem:[#allocation8 + $0x138] sm:$0xff]
        %v832 = vld [vmem:[#allocation8 + $0x140] sm:$0xff]
        %v833 = vld [vmem:[#allocation8 + $0x148] sm:$0xff]
        %v834 = vld [vmem:[#allocation8 + $0x150] sm:$0xff]
        %v835 = vld [vmem:[#allocation8 + $0x158] sm:$0xff]
        %v836 = vld [vmem:[#allocation8 + $0x160] sm:$0xff]
        %v837 = vld [vmem:[#allocation8 + $0x168] sm:$0xff]
        %v838 = vld [vmem:[#allocation8 + $0x170] sm:$0xff]
        %v839 = vld [vmem:[#allocation8 + $0x178] sm:$0xff]
        %840 = vmatprep.subr.mxu0 %v793
        %841 = vmatpush1.msra.mxu0 %v792
        %842 = vmatprep.subr.mxu0 %v796
        %843 = vmatpush1.msra.mxu0 %v795
        %844 = vmatprep.subr.mxu0 %v799
        %845 = vmatpush1.msra.mxu0 %v798
        %846 = vmatprep.subr.mxu0 %v802
        %847 = vmatpush1.msra.mxu0 %v801
        %848 = vmatprep.subr.mxu0 %v805
        %849 = vmatpush1.msra.mxu0 %v804
        %850 = vmatprep.subr.mxu0 %v808
        %851 = vmatpush1.msra.mxu0 %v807
        %852 = vmatprep.subr.mxu0 %v811
        %853 = vmatpush1.msra.mxu0 %v810
        %854 = vmatprep.subr.mxu0 %v814
        %855 = vmatpush1.msra.mxu0 %v813
        %856 = vmatprep.subr.mxu0 %v817
        %857 = vmatpush1.msra.mxu0 %v816
        %858 = vmatprep.subr.mxu0 %v820
        %859 = vmatpush1.msra.mxu0 %v819
        %860 = vmatprep.subr.mxu0 %v823
        %861 = vmatpush1.msra.mxu0 %v822
        %862 = vmatprep.subr.mxu0 %v826
        %863 = vmatpush1.msra.mxu0 %v825
        %864 = vmatprep.subr.mxu0 %v829
        %865 = vmatpush1.msra.mxu0 %v828
        %866 = vmatprep.subr.mxu0 %v832
        %867 = vmatpush1.msra.mxu0 %v831
        %868 = vmatprep.subr.mxu0 %v835
        %869 = vmatpush1.msra.mxu0 %v834
        %870 = vmatprep.subr.mxu0 %v838
        %871 = vmatpush1.msra.mxu0 %v837
        %872 = vmatprep.subr.mxu0 0.0
        %873 = vmatpush1.msra.mxu0 0.0
        %874 = vmatprep.subr.mxu0 0.0
        %875 = vmatpush1.msra.mxu0 0.0
        %876 = vmatprep.subr.mxu0 0.0
        %877 = vmatpush1.msra.mxu0 0.0
        %878 = vmatprep.subr.mxu0 0.0
        %879 = vmatpush1.msra.mxu0 0.0
        %880 = vmatprep.subr.mxu0 0.0
        %881 = vmatpush1.msra.mxu0 0.0
        %882 = vmatprep.subr.mxu0 0.0
        %883 = vmatpush1.msra.mxu0 0.0
        %884 = vmatprep.subr.mxu0 0.0
        %885 = vmatpush1.msra.mxu0 0.0
        %886 = vmatprep.subr.mxu0 0.0
        %887 = vmatpush1.msra.mxu0 0.0
        %888 = vmatprep.subr.mxu0 0.0
        %889 = vmatpush1.msra.mxu0 0.0
        %890 = vmatprep.subr.mxu0 0.0
        %891 = vmatpush1.msra.mxu0 0.0
        %892 = vmatprep.subr.mxu0 0.0
        %893 = vmatpush1.msra.mxu0 0.0
        %894 = vmatprep.subr.mxu0 0.0
        %895 = vmatpush1.msra.mxu0 0.0
        %896 = vmatprep.subr.mxu0 0.0
        %897 = vmatpush1.msra.mxu0 0.0
        %898 = vmatprep.subr.mxu0 0.0
        %899 = vmatpush1.msra.mxu0 0.0
        %900 = vmatprep.subr.mxu0 0.0
        %901 = vmatpush1.msra.mxu0 0.0
        %902 = vmatprep.subr.mxu0 0.0
        %903 = vmatpush1.msra.mxu0 0.0
        %904 = vmatprep.mubr.f32.mxu0 0.0
        %905 = vmatmul.mubr.f32.gmra.mrb[0].mxu0 %v523
        %v906 = vpop.f32.mrb[0].mxu0
        %v907 = vadd.f32 0.0, %v906
        %v908 = vpop.f32.mrb[0].mxu0
        %v909 = vadd.f32 0.0, %v908
        %910 = vmatprep.mubr.f32.mxu0 0.0
        %911 = vmatmul.mubr.f32.gmra.mrb[0].mxu0 %v524
        %v912 = vpop.f32.mrb[0].mxu0
        %v913 = vadd.f32 0.0, %v912
        %v914 = vpop.f32.mrb[0].mxu0
        %v915 = vadd.f32 0.0, %v914
        %916 = vdwg.mxu0
        %917 = vmatprep.subr.mxu0 0.0
        %918 = vmatpush1.msra.mxu0 %v794
        %919 = vmatprep.subr.mxu0 0.0
        %920 = vmatpush1.msra.mxu0 %v797
        %921 = vmatprep.subr.mxu0 0.0
        %922 = vmatpush1.msra.mxu0 %v800
        %923 = vmatprep.subr.mxu0 0.0
        %924 = vmatpush1.msra.mxu0 %v803
        %925 = vmatprep.subr.mxu0 0.0
        %926 = vmatpush1.msra.mxu0 %v806
        %927 = vmatprep.subr.mxu0 0.0
        %928 = vmatpush1.msra.mxu0 %v809
        %929 = vmatprep.subr.mxu0 0.0
        %930 = vmatpush1.msra.mxu0 %v812
        %931 = vmatprep.subr.mxu0 0.0
        %932 = vmatpush1.msra.mxu0 %v815
        %933 = vmatprep.subr.mxu0 0.0
        %934 = vmatpush1.msra.mxu0 %v818
        %935 = vmatprep.subr.mxu0 0.0
        %936 = vmatpush1.msra.mxu0 %v821
        %937 = vmatprep.subr.mxu0 0.0
        %938 = vmatpush1.msra.mxu0 %v824
        %939 = vmatprep.subr.mxu0 0.0
        %940 = vmatpush1.msra.mxu0 %v827
        %941 = vmatprep.subr.mxu0 0.0
        %942 = vmatpush1.msra.mxu0 %v830
        %943 = vmatprep.subr.mxu0 0.0
        %944 = vmatpush1.msra.mxu0 %v833
        %945 = vmatprep.subr.mxu0 0.0
        %946 = vmatpush1.msra.mxu0 %v836
        %947 = vmatprep.subr.mxu0 0.0
        %948 = vmatpush1.msra.mxu0 %v839
        %949 = vmatprep.subr.mxu0 0.0
        %950 = vmatpush1.msra.mxu0 0.0
        %951 = vmatprep.subr.mxu0 0.0
        %952 = vmatpush1.msra.mxu0 0.0
        %953 = vmatprep.subr.mxu0 0.0
        %954 = vmatpush1.msra.mxu0 0.0
        %955 = vmatprep.subr.mxu0 0.0
        %956 = vmatpush1.msra.mxu0 0.0
        %957 = vmatprep.subr.mxu0 0.0
        %958 = vmatpush1.msra.mxu0 0.0
        %959 = vmatprep.subr.mxu0 0.0
        %960 = vmatpush1.msra.mxu0 0.0
        %961 = vmatprep.subr.mxu0 0.0
        %962 = vmatpush1.msra.mxu0 0.0
        %963 = vmatprep.subr.mxu0 0.0
        %964 = vmatpush1.msra.mxu0 0.0
        %965 = vmatprep.subr.mxu0 0.0
        %966 = vmatpush1.msra.mxu0 0.0
        %967 = vmatprep.subr.mxu0 0.0
        %968 = vmatpush1.msra.mxu0 0.0
        %969 = vmatprep.subr.mxu0 0.0
        %970 = vmatpush1.msra.mxu0 0.0
        %971 = vmatprep.subr.mxu0 0.0
        %972 = vmatpush1.msra.mxu0 0.0
        %973 = vmatprep.subr.mxu0 0.0
        %974 = vmatpush1.msra.mxu0 0.0
        %975 = vmatprep.subr.mxu0 0.0
        %976 = vmatpush1.msra.mxu0 0.0
        %977 = vmatprep.subr.mxu0 0.0
        %978 = vmatpush1.msra.mxu0 0.0
        %979 = vmatprep.subr.mxu0 0.0
        %980 = vmatpush1.msra.mxu0 0.0
        %981 = vmatprep.mubr.f32.mxu0 0.0
        %982 = vmatmul.mubr.f32.gmra.mrb[0].mxu0 %v523
        %v983 = vpop.f32.mrb[0].mxu0
        %v984 = vadd.f32 0.0, %v983
        %v985 = vpop.f32.mrb[0].mxu0
        %986 = vmatprep.mubr.f32.mxu0 0.0
        %987 = vmatmul.mubr.f32.gmra.mrb[0].mxu0 %v524
        %v988 = vpop.f32.mrb[0].mxu0
        %v989 = vadd.f32 0.0, %v988
        %v990 = vpop.f32.mrb[0].mxu0
        %991 = vdwg.mxu0
        %v992 = vrot.slane %v907, 7
        %v993 = vrot.slane %v909, 7
        %v994 = vrot.slane %v984, 7
        %v995 = vrot.slane %v913, 7
        %v996 = vrot.slane %v915, 7
        %v997 = vrot.slane %v989, 7
        %vm998 = vcmp.lt.s32.totalorder %v668, 1
        %v999 = vsel %vm998, %v992, %v995
        %v1000 = vsel %vm998, %v993, %v996
        %v1001 = vsel %vm998, %v994, %v997
        %v1002 = vsel %vm998, %v995, %v992
        %v1003 = vsel %vm998, %v996, %v993
        %v1004 = vsel %vm998, %v997, %v994
        %v1005 = vadd.f32 %v788, %v1003
        %v1006 = vadd.f32 %v786, %v1000
        %v1007 = vadd.f32 %v790, %v1004
        %v1008 = vadd.f32 %v791, %v1001
        %v1009 = vld [vmem:[#allocation10] sm:$0xff]
        %v1010 = vld [vmem:[#allocation10 + $0x8] sm:$0xff]
        %v1011 = vld [vmem:[#allocation10 + $0x10] sm:$0xff]
        %v1012 = vld [vmem:[#allocation10 + $0x18] sm:$0xff]
        %v1013 = vld [vmem:[#allocation10 + $0x20] sm:$0xff]
        %v1014 = vld [vmem:[#allocation10 + $0x28] sm:$0xff]
        %v1015 = vld [vmem:[#allocation10 + $0x30] sm:$0xff]
        %v1016 = vld [vmem:[#allocation10 + $0x38] sm:$0xff]
        %v1017 = vld [vmem:[#allocation10 + $0x40] sm:$0xff]
        %v1018 = vld [vmem:[#allocation10 + $0x48] sm:$0xff]
        %v1019 = vld [vmem:[#allocation10 + $0x50] sm:$0xff]
        %v1020 = vld [vmem:[#allocation10 + $0x58] sm:$0xff]
        %v1021 = vld [vmem:[#allocation10 + $0x60] sm:$0xff]
        %v1022 = vld [vmem:[#allocation10 + $0x68] sm:$0xff]
        %v1023 = vld [vmem:[#allocation10 + $0x70] sm:$0xff]
        %v1024 = vld [vmem:[#allocation10 + $0x78] sm:$0xff]
        %v1025 = vld [vmem:[#allocation10 + $0x80] sm:$0xff]
        %v1026 = vld [vmem:[#allocation10 + $0x88] sm:$0xff]
        %v1027 = vld [vmem:[#allocation10 + $0x90] sm:$0xff]
        %v1028 = vld [vmem:[#allocation10 + $0x98] sm:$0xff]
        %v1029 = vld [vmem:[#allocation10 + $0xa0] sm:$0xff]
        %v1030 = vld [vmem:[#allocation10 + $0xa8] sm:$0xff]
        %v1031 = vld [vmem:[#allocation10 + $0xb0] sm:$0xff]
        %v1032 = vld [vmem:[#allocation10 + $0xb8] sm:$0xff]
        %v1033 = vld [vmem:[#allocation10 + $0xc0] sm:$0xff]
        %v1034 = vld [vmem:[#allocation10 + $0xc8] sm:$0xff]
        %v1035 = vld [vmem:[#allocation10 + $0xd0] sm:$0xff]
        %v1036 = vld [vmem:[#allocation10 + $0xd8] sm:$0xff]
        %v1037 = vld [vmem:[#allocation10 + $0xe0] sm:$0xff]
        %v1038 = vld [vmem:[#allocation10 + $0xe8] sm:$0xff]
        %v1039 = vld [vmem:[#allocation10 + $0xf0] sm:$0xff]
        %v1040 = vld [vmem:[#allocation10 + $0xf8] sm:$0xff]
        %v1041 = vld [vmem:[#allocation10 + $0x100] sm:$0xff]
        %v1042 = vld [vmem:[#allocation10 + $0x108] sm:$0xff]
        %v1043 = vld [vmem:[#allocation10 + $0x110] sm:$0xff]
        %v1044 = vld [vmem:[#allocation10 + $0x118] sm:$0xff]
        %v1045 = vld [vmem:[#allocation10 + $0x120] sm:$0xff]
        %v1046 = vld [vmem:[#allocation10 + $0x128] sm:$0xff]
        %v1047 = vld [vmem:[#allocation10 + $0x130] sm:$0xff]
        %v1048 = vld [vmem:[#allocation10 + $0x138] sm:$0xff]
        %v1049 = vld [vmem:[#allocation10 + $0x140] sm:$0xff]
        %v1050 = vld [vmem:[#allocation10 + $0x148] sm:$0xff]
        %v1051 = vld [vmem:[#allocation10 + $0x150] sm:$0xff]
        %v1052 = vld [vmem:[#allocation10 + $0x158] sm:$0xff]
        %v1053 = vld [vmem:[#allocation10 + $0x160] sm:$0xff]
        %v1054 = vld [vmem:[#allocation10 + $0x168] sm:$0xff]
        %v1055 = vld [vmem:[#allocation10 + $0x170] sm:$0xff]
        %v1056 = vld [vmem:[#allocation10 + $0x178] sm:$0xff]
        %1057 = vmatprep.subr.mxu0 %v1010
        %1058 = vmatpush1.msra.mxu0 %v1009
        %1059 = vmatprep.subr.mxu0 %v1013
        %1060 = vmatpush1.msra.mxu0 %v1012
        %1061 = vmatprep.subr.mxu0 %v1016
        %1062 = vmatpush1.msra.mxu0 %v1015
        %1063 = vmatprep.subr.mxu0 %v1019
        %1064 = vmatpush1.msra.mxu0 %v1018
        %1065 = vmatprep.subr.mxu0 %v1022
        %1066 = vmatpush1.msra.mxu0 %v1021
        %1067 = vmatprep.subr.mxu0 %v1025
        %1068 = vmatpush1.msra.mxu0 %v1024
        %1069 = vmatprep.subr.mxu0 %v1028
        %1070 = vmatpush1.msra.mxu0 %v1027
        %1071 = vmatprep.subr.mxu0 %v1031
        %1072 = vmatpush1.msra.mxu0 %v1030
        %1073 = vmatprep.subr.mxu0 %v1034
        %1074 = vmatpush1.msra.mxu0 %v1033
        %1075 = vmatprep.subr.mxu0 %v1037
        %1076 = vmatpush1.msra.mxu0 %v1036
        %1077 = vmatprep.subr.mxu0 %v1040
        %1078 = vmatpush1.msra.mxu0 %v1039
        %1079 = vmatprep.subr.mxu0 %v1043
        %1080 = vmatpush1.msra.mxu0 %v1042
        %1081 = vmatprep.subr.mxu0 %v1046
        %1082 = vmatpush1.msra.mxu0 %v1045
        %1083 = vmatprep.subr.mxu0 %v1049
        %1084 = vmatpush1.msra.mxu0 %v1048
        %1085 = vmatprep.subr.mxu0 %v1052
        %1086 = vmatpush1.msra.mxu0 %v1051
        %1087 = vmatprep.subr.mxu0 %v1055
        %1088 = vmatpush1.msra.mxu0 %v1054
        %1089 = vmatprep.subr.mxu0 0.0
        %1090 = vmatpush1.msra.mxu0 0.0
        %1091 = vmatprep.subr.mxu0 0.0
        %1092 = vmatpush1.msra.mxu0 0.0
        %1093 = vmatprep.subr.mxu0 0.0
        %1094 = vmatpush1.msra.mxu0 0.0
        %1095 = vmatprep.subr.mxu0 0.0
        %1096 = vmatpush1.msra.mxu0 0.0
        %1097 = vmatprep.subr.mxu0 0.0
        %1098 = vmatpush1.msra.mxu0 0.0
        %1099 = vmatprep.subr.mxu0 0.0
        %1100 = vmatpush1.msra.mxu0 0.0
        %1101 = vmatprep.subr.mxu0 0.0
        %1102 = vmatpush1.msra.mxu0 0.0
        %1103 = vmatprep.subr.mxu0 0.0
        %1104 = vmatpush1.msra.mxu0 0.0
        %1105 = vmatprep.subr.mxu0 0.0
        %1106 = vmatpush1.msra.mxu0 0.0
        %1107 = vmatprep.subr.mxu0 0.0
        %1108 = vmatpush1.msra.mxu0 0.0
        %1109 = vmatprep.subr.mxu0 0.0
        %1110 = vmatpush1.msra.mxu0 0.0
        %1111 = vmatprep.subr.mxu0 0.0
        %1112 = vmatpush1.msra.mxu0 0.0
        %1113 = vmatprep.subr.mxu0 0.0
        %1114 = vmatpush1.msra.mxu0 0.0
        %1115 = vmatprep.subr.mxu0 0.0
        %1116 = vmatpush1.msra.mxu0 0.0
        %1117 = vmatprep.subr.mxu0 0.0
        %1118 = vmatpush1.msra.mxu0 0.0
        %1119 = vmatprep.subr.mxu0 0.0
        %1120 = vmatpush1.msra.mxu0 0.0
        %1121 = vmatprep.mubr.f32.mxu0 0.0
        %1122 = vmatmul.mubr.f32.gmra.mrb[0].mxu0 %v523
        %v1123 = vpop.f32.mrb[0].mxu0
        %v1124 = vadd.f32 0.0, %v1123
        %v1125 = vpop.f32.mrb[0].mxu0
        %v1126 = vadd.f32 0.0, %v1125
        %1127 = vmatprep.mubr.f32.mxu0 0.0
        %1128 = vmatmul.mubr.f32.gmra.mrb[0].mxu0 %v524
        %v1129 = vpop.f32.mrb[0].mxu0
        %v1130 = vadd.f32 0.0, %v1129
        %v1131 = vpop.f32.mrb[0].mxu0
        %v1132 = vadd.f32 0.0, %v1131
        %1133 = vdwg.mxu0
        %1134 = vmatprep.subr.mxu0 0.0
        %1135 = vmatpush1.msra.mxu0 %v1011
        %1136 = vmatprep.subr.mxu0 0.0
        %1137 = vmatpush1.msra.mxu0 %v1014
        %1138 = vmatprep.subr.mxu0 0.0
        %1139 = vmatpush1.msra.mxu0 %v1017
        %1140 = vmatprep.subr.mxu0 0.0
        %1141 = vmatpush1.msra.mxu0 %v1020
        %1142 = vmatprep.subr.mxu0 0.0
        %1143 = vmatpush1.msra.mxu0 %v1023
        %1144 = vmatprep.subr.mxu0 0.0
        %1145 = vmatpush1.msra.mxu0 %v1026
        %1146 = vmatprep.subr.mxu0 0.0
        %1147 = vmatpush1.msra.mxu0 %v1029
        %1148 = vmatprep.subr.mxu0 0.0
        %1149 = vmatpush1.msra.mxu0 %v1032
        %1150 = vmatprep.subr.mxu0 0.0
        %1151 = vmatpush1.msra.mxu0 %v1035
        %1152 = vmatprep.subr.mxu0 0.0
        %1153 = vmatpush1.msra.mxu0 %v1038
        %1154 = vmatprep.subr.mxu0 0.0
        %1155 = vmatpush1.msra.mxu0 %v1041
        %1156 = vmatprep.subr.mxu0 0.0
        %1157 = vmatpush1.msra.mxu0 %v1044
        %1158 = vmatprep.subr.mxu0 0.0
        %1159 = vmatpush1.msra.mxu0 %v1047
        %1160 = vmatprep.subr.mxu0 0.0
        %1161 = vmatpush1.msra.mxu0 %v1050
        %1162 = vmatprep.subr.mxu0 0.0
        %1163 = vmatpush1.msra.mxu0 %v1053
        %1164 = vmatprep.subr.mxu0 0.0
        %1165 = vmatpush1.msra.mxu0 %v1056
        %1166 = vmatprep.subr.mxu0 0.0
        %1167 = vmatpush1.msra.mxu0 0.0
        %1168 = vmatprep.subr.mxu0 0.0
        %1169 = vmatpush1.msra.mxu0 0.0
        %1170 = vmatprep.subr.mxu0 0.0
        %1171 = vmatpush1.msra.mxu0 0.0
        %1172 = vmatprep.subr.mxu0 0.0
        %1173 = vmatpush1.msra.mxu0 0.0
        %1174 = vmatprep.subr.mxu0 0.0
        %1175 = vmatpush1.msra.mxu0 0.0
        %1176 = vmatprep.subr.mxu0 0.0
        %1177 = vmatpush1.msra.mxu0 0.0
        %1178 = vmatprep.subr.mxu0 0.0
        %1179 = vmatpush1.msra.mxu0 0.0
        %1180 = vmatprep.subr.mxu0 0.0
        %1181 = vmatpush1.msra.mxu0 0.0
        %1182 = vmatprep.subr.mxu0 0.0
        %1183 = vmatpush1.msra.mxu0 0.0
        %1184 = vmatprep.subr.mxu0 0.0
        %1185 = vmatpush1.msra.mxu0 0.0
        %1186 = vmatprep.subr.mxu0 0.0
        %1187 = vmatpush1.msra.mxu0 0.0
        %1188 = vmatprep.subr.mxu0 0.0
        %1189 = vmatpush1.msra.mxu0 0.0
        %1190 = vmatprep.subr.mxu0 0.0
        %1191 = vmatpush1.msra.mxu0 0.0
        %1192 = vmatprep.subr.mxu0 0.0
        %1193 = vmatpush1.msra.mxu0 0.0
        %1194 = vmatprep.subr.mxu0 0.0
        %1195 = vmatpush1.msra.mxu0 0.0
        %1196 = vmatprep.subr.mxu0 0.0
        %1197 = vmatpush1.msra.mxu0 0.0
        %1198 = vmatprep.mubr.f32.mxu0 0.0
        %1199 = vmatmul.mubr.f32.gmra.mrb[0].mxu0 %v523
        %v1200 = vpop.f32.mrb[0].mxu0
        %v1201 = vadd.f32 0.0, %v1200
        %v1202 = vpop.f32.mrb[0].mxu0
        %1203 = vmatprep.mubr.f32.mxu0 0.0
        %1204 = vmatmul.mubr.f32.gmra.mrb[0].mxu0 %v524
        %v1205 = vpop.f32.mrb[0].mxu0
        %v1206 = vadd.f32 0.0, %v1205
        %v1207 = vpop.f32.mrb[0].mxu0
        %1208 = vdwg.mxu0
        %v1209 = vadd.f32 %v1002, %v1124
        %v1210 = vadd.f32 %v999, %v1130
        %v1211 = vadd.f32 %v1005, %v1126
        %v1212 = vadd.f32 %v1006, %v1132
        %v1213 = vadd.f32 %v1007, %v1201
        %v1214 = vadd.f32 %v1008, %v1206
        %v1215 = vld [vmem:[#allocation11] sm:$0xff]
        %v1216 = vld [vmem:[#allocation11 + $0x8] sm:$0xff]
        %v1217 = vld [vmem:[#allocation11 + $0x10] sm:$0xff]
        %v1218 = vld [vmem:[#allocation11 + $0x18] sm:$0xff]
        %v1219 = vld [vmem:[#allocation11 + $0x20] sm:$0xff]
        %v1220 = vld [vmem:[#allocation11 + $0x28] sm:$0xff]
        %v1221 = vld [vmem:[#allocation11 + $0x30] sm:$0xff]
        %v1222 = vld [vmem:[#allocation11 + $0x38] sm:$0xff]
        %v1223 = vld [vmem:[#allocation11 + $0x40] sm:$0xff]
        %v1224 = vld [vmem:[#allocation11 + $0x48] sm:$0xff]
        %v1225 = vld [vmem:[#allocation11 + $0x50] sm:$0xff]
        %v1226 = vld [vmem:[#allocation11 + $0x58] sm:$0xff]
        %v1227 = vld [vmem:[#allocation11 + $0x60] sm:$0xff]
        %v1228 = vld [vmem:[#allocation11 + $0x68] sm:$0xff]
        %v1229 = vld [vmem:[#allocation11 + $0x70] sm:$0xff]
        %v1230 = vld [vmem:[#allocation11 + $0x78] sm:$0xff]
        %v1231 = vld [vmem:[#allocation11 + $0x80] sm:$0xff]
        %v1232 = vld [vmem:[#allocation11 + $0x88] sm:$0xff]
        %v1233 = vld [vmem:[#allocation11 + $0x90] sm:$0xff]
        %v1234 = vld [vmem:[#allocation11 + $0x98] sm:$0xff]
        %v1235 = vld [vmem:[#allocation11 + $0xa0] sm:$0xff]
        %v1236 = vld [vmem:[#allocation11 + $0xa8] sm:$0xff]
        %v1237 = vld [vmem:[#allocation11 + $0xb0] sm:$0xff]
        %v1238 = vld [vmem:[#allocation11 + $0xb8] sm:$0xff]
        %v1239 = vld [vmem:[#allocation11 + $0xc0] sm:$0xff]
        %v1240 = vld [vmem:[#allocation11 + $0xc8] sm:$0xff]
        %v1241 = vld [vmem:[#allocation11 + $0xd0] sm:$0xff]
        %v1242 = vld [vmem:[#allocation11 + $0xd8] sm:$0xff]
        %v1243 = vld [vmem:[#allocation11 + $0xe0] sm:$0xff]
        %v1244 = vld [vmem:[#allocation11 + $0xe8] sm:$0xff]
        %v1245 = vld [vmem:[#allocation11 + $0xf0] sm:$0xff]
        %v1246 = vld [vmem:[#allocation11 + $0xf8] sm:$0xff]
        %v1247 = vld [vmem:[#allocation11 + $0x100] sm:$0xff]
        %v1248 = vld [vmem:[#allocation11 + $0x108] sm:$0xff]
        %v1249 = vld [vmem:[#allocation11 + $0x110] sm:$0xff]
        %v1250 = vld [vmem:[#allocation11 + $0x118] sm:$0xff]
        %v1251 = vld [vmem:[#allocation11 + $0x120] sm:$0xff]
        %v1252 = vld [vmem:[#allocation11 + $0x128] sm:$0xff]
        %v1253 = vld [vmem:[#allocation11 + $0x130] sm:$0xff]
        %v1254 = vld [vmem:[#allocation11 + $0x138] sm:$0xff]
        %v1255 = vld [vmem:[#allocation11 + $0x140] sm:$0xff]
        %v1256 = vld [vmem:[#allocation11 + $0x148] sm:$0xff]
        %v1257 = vld [vmem:[#allocation11 + $0x150] sm:$0xff]
        %v1258 = vld [vmem:[#allocation11 + $0x158] sm:$0xff]
        %v1259 = vld [vmem:[#allocation11 + $0x160] sm:$0xff]
        %v1260 = vld [vmem:[#allocation11 + $0x168] sm:$0xff]
        %v1261 = vld [vmem:[#allocation11 + $0x170] sm:$0xff]
        %v1262 = vld [vmem:[#allocation11 + $0x178] sm:$0xff]
        %1263 = vmatprep.subr.mxu0 %v1216
        %1264 = vmatpush1.msra.mxu0 %v1215
        %1265 = vmatprep.subr.mxu0 %v1219
        %1266 = vmatpush1.msra.mxu0 %v1218
        %1267 = vmatprep.subr.mxu0 %v1222
        %1268 = vmatpush1.msra.mxu0 %v1221
        %1269 = vmatprep.subr.mxu0 %v1225
        %1270 = vmatpush1.msra.mxu0 %v1224
        %1271 = vmatprep.subr.mxu0 %v1228
        %1272 = vmatpush1.msra.mxu0 %v1227
        %1273 = vmatprep.subr.mxu0 %v1231
        %1274 = vmatpush1.msra.mxu0 %v1230
        %1275 = vmatprep.subr.mxu0 %v1234
        %1276 = vmatpush1.msra.mxu0 %v1233
        %1277 = vmatprep.subr.mxu0 %v1237
        %1278 = vmatpush1.msra.mxu0 %v1236
        %1279 = vmatprep.subr.mxu0 %v1240
        %1280 = vmatpush1.msra.mxu0 %v1239
        %1281 = vmatprep.subr.mxu0 %v1243
        %1282 = vmatpush1.msra.mxu0 %v1242
        %1283 = vmatprep.subr.mxu0 %v1246
        %1284 = vmatpush1.msra.mxu0 %v1245
        %1285 = vmatprep.subr.mxu0 %v1249
        %1286 = vmatpush1.msra.mxu0 %v1248
        %1287 = vmatprep.subr.mxu0 %v1252
        %1288 = vmatpush1.msra.mxu0 %v1251
        %1289 = vmatprep.subr.mxu0 %v1255
        %1290 = vmatpush1.msra.mxu0 %v1254
        %1291 = vmatprep.subr.mxu0 %v1258
        %1292 = vmatpush1.msra.mxu0 %v1257
        %1293 = vmatprep.subr.mxu0 %v1261
        %1294 = vmatpush1.msra.mxu0 %v1260
        %1295 = vmatprep.subr.mxu0 0.0
        %1296 = vmatpush1.msra.mxu0 0.0
        %1297 = vmatprep.subr.mxu0 0.0
        %1298 = vmatpush1.msra.mxu0 0.0
        %1299 = vmatprep.subr.mxu0 0.0
        %1300 = vmatpush1.msra.mxu0 0.0
        %1301 = vmatprep.subr.mxu0 0.0
        %1302 = vmatpush1.msra.mxu0 0.0
        %1303 = vmatprep.subr.mxu0 0.0
        %1304 = vmatpush1.msra.mxu0 0.0
        %1305 = vmatprep.subr.mxu0 0.0
        %1306 = vmatpush1.msra.mxu0 0.0
        %1307 = vmatprep.subr.mxu0 0.0
        %1308 = vmatpush1.msra.mxu0 0.0
        %1309 = vmatprep.subr.mxu0 0.0
        %1310 = vmatpush1.msra.mxu0 0.0
        %1311 = vmatprep.subr.mxu0 0.0
        %1312 = vmatpush1.msra.mxu0 0.0
        %1313 = vmatprep.subr.mxu0 0.0
        %1314 = vmatpush1.msra.mxu0 0.0
        %1315 = vmatprep.subr.mxu0 0.0
        %1316 = vmatpush1.msra.mxu0 0.0
        %1317 = vmatprep.subr.mxu0 0.0
        %1318 = vmatpush1.msra.mxu0 0.0
        %1319 = vmatprep.subr.mxu0 0.0
        %1320 = vmatpush1.msra.mxu0 0.0
        %1321 = vmatprep.subr.mxu0 0.0
        %1322 = vmatpush1.msra.mxu0 0.0
        %1323 = vmatprep.subr.mxu0 0.0
        %1324 = vmatpush1.msra.mxu0 0.0
        %1325 = vmatprep.subr.mxu0 0.0
        %1326 = vmatpush1.msra.mxu0 0.0
        %1327 = vmatprep.mubr.f32.mxu0 0.0
        %1328 = vmatmul.mubr.f32.gmra.mrb[0].mxu0 %v523
        %v1329 = vpop.f32.mrb[0].mxu0
        %v1330 = vadd.f32 0.0, %v1329
        %v1331 = vpop.f32.mrb[0].mxu0
        %v1332 = vadd.f32 0.0, %v1331
        %1333 = vmatprep.mubr.f32.mxu0 0.0
        %1334 = vmatmul.mubr.f32.gmra.mrb[0].mxu0 %v524
        %v1335 = vpop.f32.mrb[0].mxu0
        %v1336 = vadd.f32 0.0, %v1335
        %v1337 = vpop.f32.mrb[0].mxu0
        %v1338 = vadd.f32 0.0, %v1337
        %1339 = vdwg.mxu0
        %1340 = vmatprep.subr.mxu0 0.0
        %1341 = vmatpush1.msra.mxu0 %v1217
        %1342 = vmatprep.subr.mxu0 0.0
        %1343 = vmatpush1.msra.mxu0 %v1220
        %1344 = vmatprep.subr.mxu0 0.0
        %1345 = vmatpush1.msra.mxu0 %v1223
        %1346 = vmatprep.subr.mxu0 0.0
        %1347 = vmatpush1.msra.mxu0 %v1226
        %1348 = vmatprep.subr.mxu0 0.0
        %1349 = vmatpush1.msra.mxu0 %v1229
        %1350 = vmatprep.subr.mxu0 0.0
        %1351 = vmatpush1.msra.mxu0 %v1232
        %1352 = vmatprep.subr.mxu0 0.0
        %1353 = vmatpush1.msra.mxu0 %v1235
        %1354 = vmatprep.subr.mxu0 0.0
        %1355 = vmatpush1.msra.mxu0 %v1238
        %1356 = vmatprep.subr.mxu0 0.0
        %1357 = vmatpush1.msra.mxu0 %v1241
        %1358 = vmatprep.subr.mxu0 0.0
        %1359 = vmatpush1.msra.mxu0 %v1244
        %1360 = vmatprep.subr.mxu0 0.0
        %1361 = vmatpush1.msra.mxu0 %v1247
        %1362 = vmatprep.subr.mxu0 0.0
        %1363 = vmatpush1.msra.mxu0 %v1250
        %1364 = vmatprep.subr.mxu0 0.0
        %1365 = vmatpush1.msra.mxu0 %v1253
        %1366 = vmatprep.subr.mxu0 0.0
        %1367 = vmatpush1.msra.mxu0 %v1256
        %1368 = vmatprep.subr.mxu0 0.0
        %1369 = vmatpush1.msra.mxu0 %v1259
        %1370 = vmatprep.subr.mxu0 0.0
        %1371 = vmatpush1.msra.mxu0 %v1262
        %1372 = vmatprep.subr.mxu0 0.0
        %1373 = vmatpush1.msra.mxu0 0.0
        %1374 = vmatprep.subr.mxu0 0.0
        %1375 = vmatpush1.msra.mxu0 0.0
        %1376 = vmatprep.subr.mxu0 0.0
        %1377 = vmatpush1.msra.mxu0 0.0
        %1378 = vmatprep.subr.mxu0 0.0
        %1379 = vmatpush1.msra.mxu0 0.0
        %1380 = vmatprep.subr.mxu0 0.0
        %1381 = vmatpush1.msra.mxu0 0.0
        %1382 = vmatprep.subr.mxu0 0.0
        %1383 = vmatpush1.msra.mxu0 0.0
        %1384 = vmatprep.subr.mxu0 0.0
        %1385 = vmatpush1.msra.mxu0 0.0
        %1386 = vmatprep.subr.mxu0 0.0
        %1387 = vmatpush1.msra.mxu0 0.0
        %1388 = vmatprep.subr.mxu0 0.0
        %1389 = vmatpush1.msra.mxu0 0.0
        %1390 = vmatprep.subr.mxu0 0.0
        %1391 = vmatpush1.msra.mxu0 0.0
        %1392 = vmatprep.subr.mxu0 0.0
        %1393 = vmatpush1.msra.mxu0 0.0
        %1394 = vmatprep.subr.mxu0 0.0
        %1395 = vmatpush1.msra.mxu0 0.0
        %1396 = vmatprep.subr.mxu0 0.0
        %1397 = vmatpush1.msra.mxu0 0.0
        %1398 = vmatprep.subr.mxu0 0.0
        %1399 = vmatpush1.msra.mxu0 0.0
        %1400 = vmatprep.subr.mxu0 0.0
        %1401 = vmatpush1.msra.mxu0 0.0
        %1402 = vmatprep.subr.mxu0 0.0
        %1403 = vmatpush1.msra.mxu0 0.0
        %1404 = vmatprep.mubr.f32.mxu0 0.0
        %1405 = vmatmul.mubr.f32.gmra.mrb[0].mxu0 %v523
        %v1406 = vpop.f32.mrb[0].mxu0
        %v1407 = vadd.f32 0.0, %v1406
        %v1408 = vpop.f32.mrb[0].mxu0
        %1409 = vmatprep.mubr.f32.mxu0 0.0
        %1410 = vmatmul.mubr.f32.gmra.mrb[0].mxu0 %v524
        %v1411 = vpop.f32.mrb[0].mxu0
        %v1412 = vadd.f32 0.0, %v1411
        %v1413 = vpop.f32.mrb[0].mxu0
        %1414 = vdwg.mxu0
        %v1415 = vrot.slane %v1330, 1
        %v1416 = vrot.slane %v1332, 1
        %v1417 = vrot.slane %v1407, 1
        %v1418 = vrot.slane %v1336, 1
        %v1419 = vrot.slane %v1338, 1
        %v1420 = vrot.slane %v1412, 1
        %vm1421 = vcmp.lt.s32.totalorder %v668, 7
        %v1422 = vsel %vm1421, %v1415, %v1418
        %v1423 = vsel %vm1421, %v1416, %v1419
        %v1424 = vsel %vm1421, %v1417, %v1420
        %v1425 = vsel %vm1421, %v1418, %v1415
        %v1426 = vsel %vm1421, %v1419, %v1416
        %v1427 = vsel %vm1421, %v1420, %v1417
        %v1428 = vadd.f32 %v1209, %v1422
        %v1429 = vadd.f32 %v1210, %v1425
        %v1430 = vadd.f32 %v1211, %v1423
        %v1431 = vadd.f32 %v1212, %v1426
        %v1432 = vadd.f32 %v1213, %v1424
        %v1433 = vadd.f32 %v1214, %v1427
        %v1434 = vld [vmem:[#allocation13] sm:$0xff]
        %v1435 = vld [vmem:[#allocation13 + $0x8] sm:$0xff]
        %v1436 = vld [vmem:[#allocation13 + $0x10] sm:$0xff]
        %v1437 = vld [vmem:[#allocation13 + $0x18] sm:$0xff]
        %v1438 = vld [vmem:[#allocation13 + $0x20] sm:$0xff]
        %v1439 = vld [vmem:[#allocation13 + $0x28] sm:$0xff]
        %v1440 = vld [vmem:[#allocation13 + $0x30] sm:$0xff]
        %v1441 = vld [vmem:[#allocation13 + $0x38] sm:$0xff]
        %v1442 = vld [vmem:[#allocation13 + $0x40] sm:$0xff]
        %v1443 = vld [vmem:[#allocation13 + $0x48] sm:$0xff]
        %v1444 = vld [vmem:[#allocation13 + $0x50] sm:$0xff]
        %v1445 = vld [vmem:[#allocation13 + $0x58] sm:$0xff]
        %v1446 = vld [vmem:[#allocation13 + $0x60] sm:$0xff]
        %v1447 = vld [vmem:[#allocation13 + $0x68] sm:$0xff]
        %v1448 = vld [vmem:[#allocation13 + $0x70] sm:$0xff]
        %v1449 = vld [vmem:[#allocation13 + $0x78] sm:$0xff]
        %v1450 = vld [vmem:[#allocation13 + $0x80] sm:$0xff]
        %v1451 = vld [vmem:[#allocation13 + $0x88] sm:$0xff]
        %v1452 = vld [vmem:[#allocation13 + $0x90] sm:$0xff]
        %v1453 = vld [vmem:[#allocation13 + $0x98] sm:$0xff]
        %v1454 = vld [vmem:[#allocation13 + $0xa0] sm:$0xff]
        %v1455 = vld [vmem:[#allocation13 + $0xa8] sm:$0xff]
        %v1456 = vld [vmem:[#allocation13 + $0xb0] sm:$0xff]
        %v1457 = vld [vmem:[#allocation13 + $0xb8] sm:$0xff]
        %v1458 = vld [vmem:[#allocation13 + $0xc0] sm:$0xff]
        %v1459 = vld [vmem:[#allocation13 + $0xc8] sm:$0xff]
        %v1460 = vld [vmem:[#allocation13 + $0xd0] sm:$0xff]
        %v1461 = vld [vmem:[#allocation13 + $0xd8] sm:$0xff]
        %v1462 = vld [vmem:[#allocation13 + $0xe0] sm:$0xff]
        %v1463 = vld [vmem:[#allocation13 + $0xe8] sm:$0xff]
        %v1464 = vld [vmem:[#allocation13 + $0xf0] sm:$0xff]
        %v1465 = vld [vmem:[#allocation13 + $0xf8] sm:$0xff]
        %1466 = vmatprep.subr.mxu0 %v1435
        %1467 = vmatpush1.msra.mxu0 %v1434
        %1468 = vmatprep.subr.mxu0 %v1437
        %1469 = vmatpush1.msra.mxu0 %v1436
        %1470 = vmatprep.subr.mxu0 %v1439
        %1471 = vmatpush1.msra.mxu0 %v1438
        %1472 = vmatprep.subr.mxu0 %v1441
        %1473 = vmatpush1.msra.mxu0 %v1440
        %1474 = vmatprep.subr.mxu0 %v1443
        %1475 = vmatpush1.msra.mxu0 %v1442
        %1476 = vmatprep.subr.mxu0 %v1445
        %1477 = vmatpush1.msra.mxu0 %v1444
        %1478 = vmatprep.subr.mxu0 %v1447
        %1479 = vmatpush1.msra.mxu0 %v1446
        %1480 = vmatprep.subr.mxu0 %v1449
        %1481 = vmatpush1.msra.mxu0 %v1448
        %1482 = vmatprep.subr.mxu0 %v1451
        %1483 = vmatpush1.msra.mxu0 %v1450
        %1484 = vmatprep.subr.mxu0 %v1453
        %1485 = vmatpush1.msra.mxu0 %v1452
        %1486 = vmatprep.subr.mxu0 %v1455
        %1487 = vmatpush1.msra.mxu0 %v1454
        %1488 = vmatprep.subr.mxu0 %v1457
        %1489 = vmatpush1.msra.mxu0 %v1456
        %1490 = vmatprep.subr.mxu0 %v1459
        %1491 = vmatpush1.msra.mxu0 %v1458
        %1492 = vmatprep.subr.mxu0 %v1461
        %1493 = vmatpush1.msra.mxu0 %v1460
        %1494 = vmatprep.subr.mxu0 %v1463
        %1495 = vmatpush1.msra.mxu0 %v1462
        %1496 = vmatprep.subr.mxu0 %v1465
        %1497 = vmatpush1.msra.mxu0 %v1464
        %1498 = vmatprep.subr.mxu0 0.0
        %1499 = vmatpush1.msra.mxu0 0.0
        %1500 = vmatprep.subr.mxu0 0.0
        %1501 = vmatpush1.msra.mxu0 0.0
        %1502 = vmatprep.subr.mxu0 0.0
        %1503 = vmatpush1.msra.mxu0 0.0
        %1504 = vmatprep.subr.mxu0 0.0
        %1505 = vmatpush1.msra.mxu0 0.0
        %1506 = vmatprep.subr.mxu0 0.0
        %1507 = vmatpush1.msra.mxu0 0.0
        %1508 = vmatprep.subr.mxu0 0.0
        %1509 = vmatpush1.msra.mxu0 0.0
        %1510 = vmatprep.subr.mxu0 0.0
        %1511 = vmatpush1.msra.mxu0 0.0
        %1512 = vmatprep.subr.mxu0 0.0
        %1513 = vmatpush1.msra.mxu0 0.0
        %1514 = vmatprep.subr.mxu0 0.0
        %1515 = vmatpush1.msra.mxu0 0.0
        %1516 = vmatprep.subr.mxu0 0.0
        %1517 = vmatpush1.msra.mxu0 0.0
        %1518 = vmatprep.subr.mxu0 0.0
        %1519 = vmatpush1.msra.mxu0 0.0
        %1520 = vmatprep.subr.mxu0 0.0
        %1521 = vmatpush1.msra.mxu0 0.0
        %1522 = vmatprep.subr.mxu0 0.0
        %1523 = vmatpush1.msra.mxu0 0.0
        %1524 = vmatprep.subr.mxu0 0.0
        %1525 = vmatpush1.msra.mxu0 0.0
        %1526 = vmatprep.subr.mxu0 0.0
        %1527 = vmatpush1.msra.mxu0 0.0
        %1528 = vmatprep.subr.mxu0 0.0
        %1529 = vmatpush1.msra.mxu0 0.0
        %1530 = vmatprep.mubr.f32.mxu0 0.0
        %1531 = vmatmul.mubr.f32.gmra.mrb[0].mxu0 %v523
        %v1532 = vpop.f32.mrb[0].mxu0
        %v1533 = vadd.f32 0.0, %v1532
        %v1534 = vpop.f32.mrb[0].mxu0
        %v1535 = vadd.f32 0.0, %v1534
        %1536 = vmatprep.mubr.f32.mxu0 0.0
        %1537 = vmatmul.mubr.f32.gmra.mrb[0].mxu0 %v524
        %v1538 = vpop.f32.mrb[0].mxu0
        %v1539 = vadd.f32 0.0, %v1538
        %v1540 = vpop.f32.mrb[0].mxu0
        %v1541 = vadd.f32 0.0, %v1540
        %1542 = vdwg.mxu0
        %v1543 = vrot.slane %v1533, 2
        %v1544 = vrot.slane %v1535, 2
        %v1545 = vrot.slane %v1539, 2
        %v1546 = vrot.slane %v1541, 2
        %vm1547 = vcmp.lt.s32.totalorder %v668, 6
        %v1548 = vsel %vm1547, %v1543, %v1545
        %v1549 = vsel %vm1547, %v1544, %v1546
        %v1550 = vsel %vm1547, %v1545, %v1543
        %v1551 = vsel %vm1547, %v1546, %v1544
        %v1552 = vadd.f32 %v1430, %v1548
        %v1553 = vadd.f32 %v1431, %v1550
        %v1554 = vadd.f32 %v1432, %v1549
        %v1555 = vadd.f32 %v1433, %v1551
        %v1556 = vld [vmem:[#allocation14] sm:$0xff]
        %v1557 = vld [vmem:[#allocation14 + $0x8] sm:$0xff]
        %v1558 = vld [vmem:[#allocation14 + $0x10] sm:$0xff]
        %v1559 = vld [vmem:[#allocation14 + $0x18] sm:$0xff]
        %v1560 = vld [vmem:[#allocation14 + $0x20] sm:$0xff]
        %v1561 = vld [vmem:[#allocation14 + $0x28] sm:$0xff]
        %v1562 = vld [vmem:[#allocation14 + $0x30] sm:$0xff]
        %v1563 = vld [vmem:[#allocation14 + $0x38] sm:$0xff]
        %v1564 = vld [vmem:[#allocation14 + $0x40] sm:$0xff]
        %v1565 = vld [vmem:[#allocation14 + $0x48] sm:$0xff]
        %v1566 = vld [vmem:[#allocation14 + $0x50] sm:$0xff]
        %v1567 = vld [vmem:[#allocation14 + $0x58] sm:$0xff]
        %v1568 = vld [vmem:[#allocation14 + $0x60] sm:$0xff]
        %v1569 = vld [vmem:[#allocation14 + $0x68] sm:$0xff]
        %v1570 = vld [vmem:[#allocation14 + $0x70] sm:$0xff]
        %v1571 = vld [vmem:[#allocation14 + $0x78] sm:$0xff]
        %1572 = vmatprep.subr.mxu0 0.0
        %1573 = vmatpush1.msra.mxu0 %v1556
        %1574 = vmatprep.subr.mxu0 0.0
        %1575 = vmatpush1.msra.mxu0 %v1557
        %1576 = vmatprep.subr.mxu0 0.0
        %1577 = vmatpush1.msra.mxu0 %v1558
        %1578 = vmatprep.subr.mxu0 0.0
        %1579 = vmatpush1.msra.mxu0 %v1559
        %1580 = vmatprep.subr.mxu0 0.0
        %1581 = vmatpush1.msra.mxu0 %v1560
        %1582 = vmatprep.subr.mxu0 0.0
        %1583 = vmatpush1.msra.mxu0 %v1561
        %1584 = vmatprep.subr.mxu0 0.0
        %1585 = vmatpush1.msra.mxu0 %v1562
        %1586 = vmatprep.subr.mxu0 0.0
        %1587 = vmatpush1.msra.mxu0 %v1563
        %1588 = vmatprep.subr.mxu0 0.0
        %1589 = vmatpush1.msra.mxu0 %v1564
        %1590 = vmatprep.subr.mxu0 0.0
        %1591 = vmatpush1.msra.mxu0 %v1565
        %1592 = vmatprep.subr.mxu0 0.0
        %1593 = vmatpush1.msra.mxu0 %v1566
        %1594 = vmatprep.subr.mxu0 0.0
        %1595 = vmatpush1.msra.mxu0 %v1567
        %1596 = vmatprep.subr.mxu0 0.0
        %1597 = vmatpush1.msra.mxu0 %v1568
        %1598 = vmatprep.subr.mxu0 0.0
        %1599 = vmatpush1.msra.mxu0 %v1569
        %1600 = vmatprep.subr.mxu0 0.0
        %1601 = vmatpush1.msra.mxu0 %v1570
        %1602 = vmatprep.subr.mxu0 0.0
        %1603 = vmatpush1.msra.mxu0 %v1571
        %1604 = vmatprep.subr.mxu0 0.0
        %1605 = vmatpush1.msra.mxu0 0.0
        %1606 = vmatprep.subr.mxu0 0.0
        %1607 = vmatpush1.msra.mxu0 0.0
        %1608 = vmatprep.subr.mxu0 0.0
        %1609 = vmatpush1.msra.mxu0 0.0
        %1610 = vmatprep.subr.mxu0 0.0
        %1611 = vmatpush1.msra.mxu0 0.0
        %1612 = vmatprep.subr.mxu0 0.0
        %1613 = vmatpush1.msra.mxu0 0.0
        %1614 = vmatprep.subr.mxu0 0.0
        %1615 = vmatpush1.msra.mxu0 0.0
        %1616 = vmatprep.subr.mxu0 0.0
        %1617 = vmatpush1.msra.mxu0 0.0
        %1618 = vmatprep.subr.mxu0 0.0
        %1619 = vmatpush1.msra.mxu0 0.0
        %1620 = vmatprep.subr.mxu0 0.0
        %1621 = vmatpush1.msra.mxu0 0.0
        %1622 = vmatprep.subr.mxu0 0.0
        %1623 = vmatpush1.msra.mxu0 0.0
        %1624 = vmatprep.subr.mxu0 0.0
        %1625 = vmatpush1.msra.mxu0 0.0
        %1626 = vmatprep.subr.mxu0 0.0
        %1627 = vmatpush1.msra.mxu0 0.0
        %1628 = vmatprep.subr.mxu0 0.0
        %1629 = vmatpush1.msra.mxu0 0.0
        %1630 = vmatprep.subr.mxu0 0.0
        %1631 = vmatpush1.msra.mxu0 0.0
        %1632 = vmatprep.subr.mxu0 0.0
        %1633 = vmatpush1.msra.mxu0 0.0
        %1634 = vmatprep.subr.mxu0 0.0
        %1635 = vmatpush1.msra.mxu0 0.0
        %1636 = vmatprep.mubr.f32.mxu0 0.0
        %1637 = vmatmul.mubr.f32.gmra.mrb[0].mxu0 %v523
        %v1638 = vpop.f32.mrb[0].mxu0
        %v1639 = vadd.f32 0.0, %v1638
        %v1640 = vpop.f32.mrb[0].mxu0
        %1641 = vmatprep.mubr.f32.mxu0 0.0
        %1642 = vmatmul.mubr.f32.gmra.mrb[0].mxu0 %v524
        %v1643 = vpop.f32.mrb[0].mxu0
        %v1644 = vadd.f32 0.0, %v1643
        %v1645 = vpop.f32.mrb[0].mxu0
        %1646 = vdwg.mxu0
        %v1647 = vrot.slane %v1639, 3
        %v1648 = vrot.slane %v1644, 3
        %vm1649 = vcmp.lt.s32.totalorder %v668, 5
        %v1650 = vsel %vm1649, %v1647, %v1648
        %v1651 = vsel %vm1649, %v1648, %v1647
        %v1652 = vadd.f32 %v1554, %v1650
        %v1653 = vadd.f32 %v1555, %v1651
        %v1654 = vlaneseq
        %v1655 = vshrl.u32 %v1654, 7
        %v1656 = vsub.s32 0, %v1655
        %v1657 = vrot.slane %v525, %v1656
        %v1658 = vadd.f32 %v1428, %v1657
        %v1659 = vadd.f32 %v1429, %v1657
        %v1660 = vmax.f32 %v1658, 0.0
        %v1661 = vmax.f32 %v1659, 0.0
        %v1662 = vlaneseq
        %v1663 = vshrl.u32 %v1662, 7
        %v1664 = vsub.s32 1, %v1663
        %v1665 = vrot.slane %v525, %v1664
        %v1666 = vadd.f32 %v1552, %v1665
        %v1667 = vadd.f32 %v1553, %v1665
        %v1668 = vmax.f32 %v1666, 0.0
        %v1669 = vmax.f32 %v1667, 0.0
        %1670 = vmatprep.subr.mxu0 0.0
        %1671 = vmatpush1.msra.mxu0 %v542
        %1672 = vmatprep.subr.mxu0 0.0
        %1673 = vmatpush1.msra.mxu0 %v543
        %1674 = vmatprep.subr.mxu0 0.0
        %1675 = vmatpush1.msra.mxu0 %v544
        %1676 = vmatprep.subr.mxu0 0.0
        %1677 = vmatpush1.msra.mxu0 %v545
        %1678 = vmatprep.subr.mxu0 0.0
        %1679 = vmatpush1.msra.mxu0 %v546
        %1680 = vmatprep.subr.mxu0 0.0
        %1681 = vmatpush1.msra.mxu0 %v547
        %1682 = vmatprep.subr.mxu0 0.0
        %1683 = vmatpush1.msra.mxu0 %v548
        %1684 = vmatprep.subr.mxu0 0.0
        %1685 = vmatpush1.msra.mxu0 %v549
        %1686 = vmatprep.subr.mxu0 0.0
        %1687 = vmatpush1.msra.mxu0 %v550
        %1688 = vmatprep.subr.mxu0 0.0
        %1689 = vmatpush1.msra.mxu0 %v551
        %1690 = vmatprep.subr.mxu0 0.0
        %1691 = vmatpush1.msra.mxu0 %v552
        %1692 = vmatprep.subr.mxu0 0.0
        %1693 = vmatpush1.msra.mxu0 %v553
        %1694 = vmatprep.subr.mxu0 0.0
        %1695 = vmatpush1.msra.mxu0 %v554
        %1696 = vmatprep.subr.mxu0 0.0
        %1697 = vmatpush1.msra.mxu0 %v555
        %1698 = vmatprep.subr.mxu0 0.0
        %1699 = vmatpush1.msra.mxu0 %v556
        %1700 = vmatprep.subr.mxu0 0.0
        %1701 = vmatpush1.msra.mxu0 %v557
        %1702 = vmatprep.subr.mxu0 0.0
        %1703 = vmatpush1.msra.mxu0 0.0
        %1704 = vmatprep.subr.mxu0 0.0
        %1705 = vmatpush1.msra.mxu0 0.0
        %1706 = vmatprep.subr.mxu0 0.0
        %1707 = vmatpush1.msra.mxu0 0.0
        %1708 = vmatprep.subr.mxu0 0.0
        %1709 = vmatpush1.msra.mxu0 0.0
        %1710 = vmatprep.subr.mxu0 0.0
        %1711 = vmatpush1.msra.mxu0 0.0
        %1712 = vmatprep.subr.mxu0 0.0
        %1713 = vmatpush1.msra.mxu0 0.0
        %1714 = vmatprep.subr.mxu0 0.0
        %1715 = vmatpush1.msra.mxu0 0.0
        %1716 = vmatprep.subr.mxu0 0.0
        %1717 = vmatpush1.msra.mxu0 0.0
        %1718 = vmatprep.subr.mxu0 0.0
        %1719 = vmatpush1.msra.mxu0 0.0
        %1720 = vmatprep.subr.mxu0 0.0
        %1721 = vmatpush1.msra.mxu0 0.0
        %1722 = vmatprep.subr.mxu0 0.0
        %1723 = vmatpush1.msra.mxu0 0.0
        %1724 = vmatprep.subr.mxu0 0.0
        %1725 = vmatpush1.msra.mxu0 0.0
        %1726 = vmatprep.subr.mxu0 0.0
        %1727 = vmatpush1.msra.mxu0 0.0
        %1728 = vmatprep.subr.mxu0 0.0
        %1729 = vmatpush1.msra.mxu0 0.0
        %1730 = vmatprep.subr.mxu0 0.0
        %1731 = vmatpush1.msra.mxu0 0.0
        %1732 = vmatprep.subr.mxu0 0.0
        %1733 = vmatpush1.msra.mxu0 0.0
        %1734 = vmatprep.mubr.f32.mxu0 0.0
        %1735 = vmatmul.mubr.f32.gmra.mrb[0].mxu0 %v1668
        %v1736 = vpop.f32.mrb[0].mxu0
        %v1737 = vadd.f32 0.0, %v1736
        %v1738 = vpop.f32.mrb[0].mxu0
        %1739 = vmatprep.mubr.f32.mxu0 0.0
        %1740 = vmatmul.mubr.f32.gmra.mrb[0].mxu0 %v1669
        %v1741 = vpop.f32.mrb[0].mxu0
        %v1742 = vadd.f32 0.0, %v1741
        %v1743 = vpop.f32.mrb[0].mxu0
        %1744 = vdwg.mxu0
        %1745 = vmatprep.subr.mxu0 0.0
        %1746 = vmatpush1.msra.mxu0 %v526
        %1747 = vmatprep.subr.mxu0 0.0
        %1748 = vmatpush1.msra.mxu0 %v527
        %1749 = vmatprep.subr.mxu0 0.0
        %1750 = vmatpush1.msra.mxu0 %v528
        %1751 = vmatprep.subr.mxu0 0.0
        %1752 = vmatpush1.msra.mxu0 %v529
        %1753 = vmatprep.subr.mxu0 0.0
        %1754 = vmatpush1.msra.mxu0 %v530
        %1755 = vmatprep.subr.mxu0 0.0
        %1756 = vmatpush1.msra.mxu0 %v531
        %1757 = vmatprep.subr.mxu0 0.0
        %1758 = vmatpush1.msra.mxu0 %v532
        %1759 = vmatprep.subr.mxu0 0.0
        %1760 = vmatpush1.msra.mxu0 %v533
        %1761 = vmatprep.subr.mxu0 0.0
        %1762 = vmatpush1.msra.mxu0 %v534
        %1763 = vmatprep.subr.mxu0 0.0
        %1764 = vmatpush1.msra.mxu0 %v535
        %1765 = vmatprep.subr.mxu0 0.0
        %1766 = vmatpush1.msra.mxu0 %v536
        %1767 = vmatprep.subr.mxu0 0.0
        %1768 = vmatpush1.msra.mxu0 %v537
        %1769 = vmatprep.subr.mxu0 0.0
        %1770 = vmatpush1.msra.mxu0 %v538
        %1771 = vmatprep.subr.mxu0 0.0
        %1772 = vmatpush1.msra.mxu0 %v539
        %1773 = vmatprep.subr.mxu0 0.0
        %1774 = vmatpush1.msra.mxu0 %v540
        %1775 = vmatprep.subr.mxu0 0.0
        %1776 = vmatpush1.msra.mxu0 %v541
        %1777 = vmatprep.subr.mxu0 0.0
        %1778 = vmatpush1.msra.mxu0 0.0
        %1779 = vmatprep.subr.mxu0 0.0
        %1780 = vmatpush1.msra.mxu0 0.0
        %1781 = vmatprep.subr.mxu0 0.0
        %1782 = vmatpush1.msra.mxu0 0.0
        %1783 = vmatprep.subr.mxu0 0.0
        %1784 = vmatpush1.msra.mxu0 0.0
        %1785 = vmatprep.subr.mxu0 0.0
        %1786 = vmatpush1.msra.mxu0 0.0
        %1787 = vmatprep.subr.mxu0 0.0
        %1788 = vmatpush1.msra.mxu0 0.0
        %1789 = vmatprep.subr.mxu0 0.0
        %1790 = vmatpush1.msra.mxu0 0.0
        %1791 = vmatprep.subr.mxu0 0.0
        %1792 = vmatpush1.msra.mxu0 0.0
        %1793 = vmatprep.subr.mxu0 0.0
        %1794 = vmatpush1.msra.mxu0 0.0
        %1795 = vmatprep.subr.mxu0 0.0
        %1796 = vmatpush1.msra.mxu0 0.0
        %1797 = vmatprep.subr.mxu0 0.0
        %1798 = vmatpush1.msra.mxu0 0.0
        %1799 = vmatprep.subr.mxu0 0.0
        %1800 = vmatpush1.msra.mxu0 0.0
        %1801 = vmatprep.subr.mxu0 0.0
        %1802 = vmatpush1.msra.mxu0 0.0
        %1803 = vmatprep.subr.mxu0 0.0
        %1804 = vmatpush1.msra.mxu0 0.0
        %1805 = vmatprep.subr.mxu0 0.0
        %1806 = vmatpush1.msra.mxu0 0.0
        %1807 = vmatprep.subr.mxu0 0.0
        %1808 = vmatpush1.msra.mxu0 0.0
        %1809 = vmatprep.mubr.f32.mxu0 0.0
        %1810 = vmatmul.mubr.f32.gmra.mrb[0].mxu0 %v1660
        %v1811 = vpop.f32.mrb[0].mxu0
        %v1812 = vadd.f32 %v1737, %v1811
        %v1813 = vpop.f32.mrb[0].mxu0
        %1814 = vmatprep.mubr.f32.mxu0 0.0
        %1815 = vmatmul.mubr.f32.gmra.mrb[0].mxu0 %v1661
        %v1816 = vpop.f32.mrb[0].mxu0
        %v1817 = vadd.f32 %v1742, %v1816
        %v1818 = vpop.f32.mrb[0].mxu0
        %1819 = vdwg.mxu0
        %v1820 = vlaneseq
        %v1821 = vshrl.u32 %v1820, 7
        %v1822 = vsub.s32 2, %v1821
        %v1823 = vrot.slane %v525, %v1822
        %v1824 = vadd.f32 %v1652, %v1823
        %v1825 = vadd.f32 %v1653, %v1823
        %v1826 = vmax.f32 %v1824, 0.0
        %v1827 = vmax.f32 %v1825, 0.0
        %1828 = vmatprep.subr.mxu0 0.0
        %1829 = vmatpush1.msra.mxu0 %v558
        %1830 = vmatprep.subr.mxu0 0.0
        %1831 = vmatpush1.msra.mxu0 %v559
        %1832 = vmatprep.subr.mxu0 0.0
        %1833 = vmatpush1.msra.mxu0 %v560
        %1834 = vmatprep.subr.mxu0 0.0
        %1835 = vmatpush1.msra.mxu0 %v561
        %1836 = vmatprep.subr.mxu0 0.0
        %1837 = vmatpush1.msra.mxu0 %v562
        %1838 = vmatprep.subr.mxu0 0.0
        %1839 = vmatpush1.msra.mxu0 %v563
        %1840 = vmatprep.subr.mxu0 0.0
        %1841 = vmatpush1.msra.mxu0 %v564
        %1842 = vmatprep.subr.mxu0 0.0
        %1843 = vmatpush1.msra.mxu0 %v565
        %1844 = vmatprep.subr.mxu0 0.0
        %1845 = vmatpush1.msra.mxu0 %v566
        %1846 = vmatprep.subr.mxu0 0.0
        %1847 = vmatpush1.msra.mxu0 %v567
        %1848 = vmatprep.subr.mxu0 0.0
        %1849 = vmatpush1.msra.mxu0 %v568
        %1850 = vmatprep.subr.mxu0 0.0
        %1851 = vmatpush1.msra.mxu0 %v569
        %1852 = vmatprep.subr.mxu0 0.0
        %1853 = vmatpush1.msra.mxu0 %v570
        %1854 = vmatprep.subr.mxu0 0.0
        %1855 = vmatpush1.msra.mxu0 %v571
        %1856 = vmatprep.subr.mxu0 0.0
        %1857 = vmatpush1.msra.mxu0 %v572
        %1858 = vmatprep.subr.mxu0 0.0
        %1859 = vmatpush1.msra.mxu0 %v573
        %1860 = vmatprep.subr.mxu0 0.0
        %1861 = vmatpush1.msra.mxu0 0.0
        %1862 = vmatprep.subr.mxu0 0.0
        %1863 = vmatpush1.msra.mxu0 0.0
        %1864 = vmatprep.subr.mxu0 0.0
        %1865 = vmatpush1.msra.mxu0 0.0
        %1866 = vmatprep.subr.mxu0 0.0
        %1867 = vmatpush1.msra.mxu0 0.0
        %1868 = vmatprep.subr.mxu0 0.0
        %1869 = vmatpush1.msra.mxu0 0.0
        %1870 = vmatprep.subr.mxu0 0.0
        %1871 = vmatpush1.msra.mxu0 0.0
        %1872 = vmatprep.subr.mxu0 0.0
        %1873 = vmatpush1.msra.mxu0 0.0
        %1874 = vmatprep.subr.mxu0 0.0
        %1875 = vmatpush1.msra.mxu0 0.0
        %1876 = vmatprep.subr.mxu0 0.0
        %1877 = vmatpush1.msra.mxu0 0.0
        %1878 = vmatprep.subr.mxu0 0.0
        %1879 = vmatpush1.msra.mxu0 0.0
        %1880 = vmatprep.subr.mxu0 0.0
        %1881 = vmatpush1.msra.mxu0 0.0
        %1882 = vmatprep.subr.mxu0 0.0
        %1883 = vmatpush1.msra.mxu0 0.0
        %1884 = vmatprep.subr.mxu0 0.0
        %1885 = vmatpush1.msra.mxu0 0.0
        %1886 = vmatprep.subr.mxu0 0.0
        %1887 = vmatpush1.msra.mxu0 0.0
        %1888 = vmatprep.subr.mxu0 0.0
        %1889 = vmatpush1.msra.mxu0 0.0
        %1890 = vmatprep.subr.mxu0 0.0
        %1891 = vmatpush1.msra.mxu0 0.0
        %1892 = vmatprep.mubr.f32.mxu0 0.0
        %1893 = vmatmul.mubr.f32.gmra.mrb[0].mxu0 %v1826
        %v1894 = vpop.f32.mrb[0].mxu0
        %v1895 = vadd.f32 0.0, %v1894
        %v1896 = vpop.f32.mrb[0].mxu0
        %1897 = vmatprep.mubr.f32.mxu0 0.0
        %1898 = vmatmul.mubr.f32.gmra.mrb[0].mxu0 %v1827
        %v1899 = vpop.f32.mrb[0].mxu0
        %v1900 = vadd.f32 0.0, %v1899
        %v1901 = vpop.f32.mrb[0].mxu0
        %1902 = vdwg.mxu0
        %v1903 = vadd.f32 %v1812, %v1895
        %v1904 = vadd.f32 %v1817, %v1900
        %v1905 = vld [vmem:[%s10] sm:$0x1]
        %v1907 = vlaneseq
        %v1908 = vshrl.u32 %v1907, 7
        %v1909 = vsub.s32 0, %v1908
        %v1910 = vrot.slane %v1905, %v1909
        %v1912 = vadd.f32 %v1903, %v1910
        %v1913 = vadd.f32 %v1904, %v1910
        %1914 = vst [vmem:[%s520] sm:$0xff] %v1912
        %1915 = vst [vmem:[%s520 + $0x8] sm:$0xff] %v1913
        %s1916 = sand.u32 %s276, 1
        %s1917 = scalar_lea.sflag [#allocation4], %s1916
        %s1918 = sand.u32 %s276, 1
        %s1919 = smul.addr %s1918, 16
        %s1920 = scalar_lea.vmem [#allocation17], %s1919
        // Predicated region
        $region101: #{tpu_custom_call.1} parent=63 // pred_check
          %p1921 = pneg %p286
        $region102: #{tpu_custom_call.1} parent=63 // pred_check_branch
          %1923 = sbr.rel (%p1921) target = $region104
        $region103: #{tpu_custom_call.1} parent=63 // pred_region
          %s1924 = smul.u32 2, %s32
          %s1926 = ssub.s32 256, 256
          %1927 = vsyncadd %s1917, %s1926
          %s1928 = smul.addr %s1924, 128
          %s1929 = scalar_lea.hbm %s11, %s1928
          %s1930 = sshll.u32 %s1920, 4
          %s1931 = int_to_ptr.vmem [resolvable:$true] %s1930
          %1936 = dma.vmem_to_hbm [thread:$0]  %s1931, 256, %s1929, %s1917, 128, 128, 8
        $region104: #{tpu_custom_call.1} parent=63 // pred_fallthru
          _
      $region64: #{tpu_custom_call.1} parent=5 // pred_fallthru
        _
      %p1937 = scmp.le.s32.totalorder 2, %s27
      // Predicated region
      $region105: #{tpu_custom_call.1} parent=5 // pred_check
        %p1938 = pneg %p1937
      $region106: #{tpu_custom_call.1} parent=5 // pred_check_branch
        %1940 = sbr.rel (%p1938) target = $region108
      $region107: #{tpu_custom_call.1} parent=5 // pred_region
        %s1941 = ssub.s32 %s27, 2
        // Predicated region
        $region109: #{tpu_custom_call.1} parent=107 // pred_check
          %p1942 = pneg %p292
        $region110: #{tpu_custom_call.1} parent=107 // pred_check_branch
          %1944 = sbr.rel (%p1942) target = $region112
        $region111: #{tpu_custom_call.1} parent=107 // pred_region
          %s1945 = sand.u32 %s277, 1
          %s1946 = scalar_lea.sflag [#allocation4], %s1945
          %s1947 = sand.u32 %s277, 1
          %s1948 = smul.addr %s1947, 16
          %s1949 = scalar_lea.vmem [#allocation17], %s1948
          %1950 = dma.done %s1946, 256
        $region112: #{tpu_custom_call.1} parent=107 // pred_fallthru
          _
      $region108: #{tpu_custom_call.1} parent=5 // pred_fallthru
        _
    $region6: #{tpu_custom_call.1} parent=1 // loop_footer
      %s31 = sadd.s32 1, %s27
    $region7: #{tpu_custom_call.1} parent=1 // loop_footer_branch
      %26 = sbr.rel target = $region3
    $region8: #{tpu_custom_call.1} parent=1 // loop_exit
      _
    %1951 = vsyncpa [#allocation3], 1
    %s1952 = scalar_lea.sflag [#allocation3], 1
    %1953 = vsyncpa %s1952, 1
    %1954 = vsyncpa [#allocation6], 1
    %1955 = vsyncpa [#allocation9], 1
    %1956 = vsyncpa [#allocation12], 1
    %1957 = vsyncpa [#allocation15], 1
    %1958 = vsyncpa [#allocation4], 1
    %s1959 = scalar_lea.sflag [#allocation4], 1
    %1960 = vsyncpa %s1959, 1

</llo_original>
